<compile_context>
chip_gen: v7x
topology: tpu7x:2x2x1
jax: 0.10.0
libtpu: 0.0.40
codegen_flags: <defaults>
</compile_context>

<pallas_src>
import functools
import math

import jax
import jax.numpy as jnp
from jax.experimental import pallas as pl
from jax.experimental.pallas import tpu as pltpu


def _mha_kernel(q_ref, k_ref, v_ref,
                wq_ref, bq_ref, wk_ref, bk_ref, wv_ref, bv_ref,
                wfc_ref, bfc_ref,
                o_ref,
                kproj_ref, vproj_ref,
                *, n_heads, head_dim, compute_dtype):
    """One grid step = (batch b, query tile t).

    q_ref          : (1, TQ, H)  query rows of this tile   (compute dtype)
    k_ref / v_ref  : (1, S,  H)  full key/value of batch b (compute dtype)
    w*_ref         : (H, H)      pre-transposed nn.Linear weights: y = x @ W.T == x @ w_ref
    b*_ref         : (1, H)      f32 biases
    kproj_ref/vproj_ref : (S, H) VMEM scratch with projected K/V for batch b
    """
    t = pl.program_id(1)

    # --- K/V projections: once per batch (query-tile 0), reused by every tile. ---
    @pl.when(t == 0)
    def _project_kv():
        kp = jnp.dot(k_ref[0], wk_ref[...],
                     preferred_element_type=jnp.float32) + bk_ref[0]
        vp = jnp.dot(v_ref[0], wv_ref[...],
                     preferred_element_type=jnp.float32) + bv_ref[0]
        kproj_ref[...] = kp.astype(compute_dtype)
        vproj_ref[...] = vp.astype(compute_dtype)

    # --- Q projection for this tile; fold the softmax scale into Q once. ---
    inv_scale = 1.0 / math.sqrt(head_dim)
    qp = jnp.dot(q_ref[0], wq_ref[...],
                 preferred_element_type=jnp.float32) + bq_ref[0]
    qp = (qp * inv_scale).astype(compute_dtype)          # (TQ, H)

    kp = kproj_ref[...]                                   # (S, H)
    vp = vproj_ref[...]                                   # (S, H)

    # --- Per-head attention. Heads are static lane slices (no XLU transposes);
    #     QK^T contracts the last dim of both operands (trans_b dot). ---
    trans_b = (((1,), (1,)), ((), ()))
    ctx_heads = []
    for h in range(n_heads):
        sl = slice(h * head_dim, (h + 1) * head_dim)
        qh = qp[:, sl]                                    # (TQ, d)
        kh = kp[:, sl]                                    # (S,  d)
        vh = vp[:, sl]                                    # (S,  d)
        s = jax.lax.dot_general(qh, kh, trans_b,
                                preferred_element_type=jnp.float32)   # (TQ, S)
        # numerically-stable softmax, statistics kept in f32
        m = jnp.max(s, axis=-1, keepdims=True)
        e = jnp.exp(s - m)
        p = e * pl.reciprocal(jnp.sum(e, axis=-1, keepdims=True), approx=True)
        # (dropout on p: identity at inference)
        ctx_heads.append(
            jnp.dot(p.astype(compute_dtype), vh,
                    preferred_element_type=jnp.float32).astype(compute_dtype))
    ctx = jnp.concatenate(ctx_heads, axis=-1)             # (TQ, H); merge = lane concat

    out = jnp.dot(ctx, wfc_ref[...],
                  preferred_element_type=jnp.float32) + bfc_ref[0]
    o_ref[0] = out.astype(o_ref.dtype)


def _pick_q_tile(seq_len):
    for cand in (256, 128, 64, 32, 16, 8):
        if seq_len % cand == 0:
            return cand
    return seq_len   # odd seq length: single full-extent block is still legal


def multihead_attention(query, key, value, params, *, n_heads,
                        compute_dtype=jnp.bfloat16, q_tile=None):
    """query/key/value: (B, S, H). Returns (B, S, H) in query.dtype."""
    B, S, H = query.shape
    assert H % n_heads == 0
    head_dim = H // n_heads

    wq, bq, wk, bk, wv, bv, wfc, bfc = params

    # Pre-transpose the nn.Linear weights once on the host (y = x @ W.T == x @ WT)
    # and cast them to the MXU compute dtype (bf16 on v5e/v6e/v7x).
    wqT = jnp.asarray(wq.T, compute_dtype)
    wkT = jnp.asarray(wk.T, compute_dtype)
    wvT = jnp.asarray(wv.T, compute_dtype)
    wfcT = jnp.asarray(wfc.T, compute_dtype)
    # Biases stay f32 (added after the f32-accumulated matmul); 2D for (sublane, lane).
    bq2 = bq.reshape(1, H).astype(jnp.float32)
    bk2 = bk.reshape(1, H).astype(jnp.float32)
    bv2 = bv.reshape(1, H).astype(jnp.float32)
    bfc2 = bfc.reshape(1, H).astype(jnp.float32)

    qc = query.astype(compute_dtype)
    kc = key.astype(compute_dtype)
    vc = value.astype(compute_dtype)

    tq = _pick_q_tile(S) if q_tile is None else q_tile
    assert S % tq == 0 and (tq % 8 == 0 or tq == S)
    n_q_tiles = S // tq

    # Constant-index blocks (weights/biases): single-buffered — their block index never
    # changes, so double buffering would only waste VMEM (matters for H>=1024 on v7x).
    def const_spec(shape):
        idx = lambda b, t: (0,) * len(shape)
        try:
            return pl.BlockSpec(shape, idx, pipeline_mode=pl.Buffered(1))
        except TypeError:   # fallback for versions without pipeline_mode
            return pl.BlockSpec(shape, idx)

    w_spec = const_spec((H, H))
    b_spec = const_spec((1, H))
    q_spec = pl.BlockSpec((1, tq, H), lambda b, t: (b, t, 0))
    kv_spec = pl.BlockSpec((1, S, H), lambda b, t: (b, 0, 0))
    o_spec = pl.BlockSpec((1, tq, H), lambda b, t: (b, t, 0))

    wbytes = jnp.dtype(compute_dtype).itemsize
    cost = pl.CostEstimate(
        flops=int(B * (8 * S * H * H + 4 * S * S * H)),
        transcendentals=int(B * n_heads * S * S),
        bytes_accessed=int(4 * H * H * wbytes + 4 * H * 4
                           + 3 * B * S * H * wbytes
                           + B * S * H * query.dtype.itemsize),
    )

    kernel = functools.partial(_mha_kernel, n_heads=n_heads, head_dim=head_dim,
                               compute_dtype=compute_dtype)

    return pl.pallas_call(
        kernel,
        out_shape=jax.ShapeDtypeStruct((B, S, H), query.dtype),
        grid_spec=pltpu.PrefetchScalarGridSpec(
            num_scalar_prefetch=0,
            grid=(B, n_q_tiles),
            in_specs=[q_spec, kv_spec, kv_spec,
                      w_spec, b_spec, w_spec, b_spec, w_spec, b_spec,
                      w_spec, b_spec],
            out_specs=o_spec,
            scratch_shapes=[pltpu.VMEM((S, H), compute_dtype),
                            pltpu.VMEM((S, H), compute_dtype)],
        ),
        compiler_params=pltpu.CompilerParams(
            # Batch is sharded across cores; query tiles of one batch run sequentially
            # on one core so the K/V scratch written at tile 0 stays valid.
            dimension_semantics=("parallel", "arbitrary"),
            vmem_limit_bytes=64 * 1024 * 1024,
        ),
        cost_estimate=cost,
    )(qc, kc, vc, wqT, bq2, wkT, bk2, wvT, bv2, wfcT, bfc2)


def _reference(query, key, value, params, *, n_heads):
    """Pure-JAX f32 reference mirroring the PyTorch forward (mask=None, eval mode)."""
    wq, bq, wk, bk, wv, bv, wfc, bfc = params
    B, S, H = query.shape
    d = H // n_heads
    Q = query @ wq.T + bq
    K = key @ wk.T + bk
    V = value @ wv.T + bv
    Q = Q.reshape(B, S, n_heads, d).transpose(0, 2, 1, 3)
    K = K.reshape(B, S, n_heads, d).transpose(0, 2, 1, 3)
    V = V.reshape(B, S, n_heads, d).transpose(0, 2, 1, 3)
    att = (Q @ K.transpose(0, 1, 3, 2)) / math.sqrt(d)
    att = jax.nn.softmax(att, axis=-1)
    x = att @ V
    x = x.transpose(0, 2, 1, 3).reshape(B, S, H)
    return x @ wfc.T + bfc


if __name__ == "__main__":
    # small, module-consistent shapes
    B, S, H, n_heads = 2, 16, 32, 4
    root = jax.random.PRNGKey(0)
    ks = jax.random.split(root, 12)

    def lin(kw, kb, out_dim, in_dim):
        bound = 1.0 / math.sqrt(in_dim)
        w = jax.random.uniform(kw, (out_dim, in_dim), jnp.float32, -bound, bound)
        b = jax.random.uniform(kb, (out_dim,), jnp.float32, -bound, bound)
        return w, b

    wq, bq = lin(ks[0], ks[1], H, H)
    wk, bk = lin(ks[2], ks[3], H, H)
    wv, bv = lin(ks[4], ks[5], H, H)
    wfc, bfc = lin(ks[6], ks[7], H, H)
    params = (wq, bq, wk, bk, wv, bv, wfc, bfc)

    query = jax.random.normal(ks[8], (B, S, H), jnp.float32)
    key_in = jax.random.normal(ks[9], (B, S, H), jnp.float32)
    value = jax.random.normal(ks[10], (B, S, H), jnp.float32)

    ref = _reference(query, key_in, value, params, n_heads=n_heads)

    # f32 compute path, 2 query tiles (exercises the per-batch K/V scratch reuse).
    out_f32 = multihead_attention(query, key_in, value, params, n_heads=n_heads,
                                  compute_dtype=jnp.float32, q_tile=8)
    out_f32 = jax.block_until_ready(out_f32)
    assert out_f32.shape == (B, S, H)
    assert jnp.allclose(out_f32, ref, atol=5e-3, rtol=5e-3), \
        f"f32 path mismatch, max abs err={jnp.max(jnp.abs(out_f32 - ref))}"

    # Default bf16 MXU-operand path (f32 accumulation + f32 softmax stats).
    out_bf16 = multihead_attention(query, key_in, value, params, n_heads=n_heads)
    out_bf16 = jax.block_until_ready(out_bf16)
    assert out_bf16.shape == (B, S, H)
    assert jnp.allclose(out_bf16, ref, atol=5e-2, rtol=5e-2), \
        f"bf16 path mismatch, max abs err={jnp.max(jnp.abs(out_bf16 - ref))}"

    print("KERNEL_OK")
</pallas_src>

<mosaic_0001>
module attributes {stable_mosaic.version = 11 : i64} {
  func.func @_mha_kernel(%arg0: i32, %arg1: i32, %arg2: memref<1x8x32xf32, #tpu.memory_space<vmem>>, %arg3: memref<1x16x32xf32, #tpu.memory_space<vmem>>, %arg4: memref<1x16x32xf32, #tpu.memory_space<vmem>>, %arg5: memref<32x32xf32, #tpu.memory_space<vmem>>, %arg6: memref<1x32xf32, #tpu.memory_space<vmem>>, %arg7: memref<32x32xf32, #tpu.memory_space<vmem>>, %arg8: memref<1x32xf32, #tpu.memory_space<vmem>>, %arg9: memref<32x32xf32, #tpu.memory_space<vmem>>, %arg10: memref<1x32xf32, #tpu.memory_space<vmem>>, %arg11: memref<32x32xf32, #tpu.memory_space<vmem>>, %arg12: memref<1x32xf32, #tpu.memory_space<vmem>>, %arg13: memref<1x8x32xf32, #tpu.memory_space<vmem>>, %arg14: memref<16x32xf32, #tpu.memory_space<vmem>>, %arg15: memref<16x32xf32, #tpu.memory_space<vmem>>) attributes {dimension_semantics = [#tpu.dimension_semantics<parallel>, #tpu.dimension_semantics<arbitrary>], iteration_bounds = array<i64: 2, 2>, scalar_prefetch = 0 : i64, scratch_operands = 2 : i64, tpu.core_type = #tpu.core_type<tc>, window_params = [{transform_indices = @transform_0, window_bounds = array<i64: 1, 8, 32>}, {transform_indices = @transform_1, window_bounds = array<i64: 1, 16, 32>}, {transform_indices = @transform_2, window_bounds = array<i64: 1, 16, 32>}, {pipeline_mode = #tpu.pipeline_mode<synchronous>, transform_indices = @transform_3, window_bounds = array<i64: 32, 32>}, {pipeline_mode = #tpu.pipeline_mode<synchronous>, transform_indices = @transform_4, window_bounds = array<i64: 1, 32>}, {pipeline_mode = #tpu.pipeline_mode<synchronous>, transform_indices = @transform_5, window_bounds = array<i64: 32, 32>}, {pipeline_mode = #tpu.pipeline_mode<synchronous>, transform_indices = @transform_6, window_bounds = array<i64: 1, 32>}, {pipeline_mode = #tpu.pipeline_mode<synchronous>, transform_indices = @transform_7, window_bounds = array<i64: 32, 32>}, {pipeline_mode = #tpu.pipeline_mode<synchronous>, transform_indices = @transform_8, window_bounds = array<i64: 1, 32>}, {pipeline_mode = #tpu.pipeline_mode<synchronous>, transform_indices = @transform_9, window_bounds = array<i64: 32, 32>}, {pipeline_mode = #tpu.pipeline_mode<synchronous>, transform_indices = @transform_10, window_bounds = array<i64: 1, 32>}, {transform_indices = @transform_11, window_bounds = array<i64: 1, 8, 32>}]} {
    %c0_i32 = arith.constant 0 : i32
    %0 = arith.cmpi eq, %arg1, %c0_i32 : i32
    %1 = arith.extui %0 : i1 to i32
    %c0_i32_0 = arith.constant 0 : i32
    %2 = arith.cmpi ne, %1, %c0_i32_0 : i32
    scf.if %2 {
      %c0_36 = arith.constant 0 : index
      %c0_37 = arith.constant 0 : index
      %c0_38 = arith.constant 0 : index
      %87 = vector.load %arg3[%c0_36, %c0_37, %c0_38] : memref<1x16x32xf32, #tpu.memory_space<vmem>>, vector<1x16x32xf32>
      %88 = vector.shape_cast %87 : vector<1x16x32xf32> to vector<16x32xf32>
      %c0_39 = arith.constant 0 : index
      %c0_40 = arith.constant 0 : index
      %89 = vector.load %arg7[%c0_39, %c0_40] : memref<32x32xf32, #tpu.memory_space<vmem>>, vector<32x32xf32>
      %cst_41 = arith.constant dense<0.000000e+00> : vector<16x32xf32>
      %90 = tpu.matmul %88, %89, %cst_41 {dimension_numbers = #tpu.dot_dimension_numbers<[1], [0], [0], [1], [0, 0, 1, 1], [], []>} : vector<16x32xf32>, vector<32x32xf32>, vector<16x32xf32> -> vector<16x32xf32>
      %c0_42 = arith.constant 0 : index
      %c0_43 = arith.constant 0 : index
      %91 = vector.load %arg8[%c0_42, %c0_43] : memref<1x32xf32, #tpu.memory_space<vmem>>, vector<1x32xf32>
      %92 = vector.shape_cast %91 : vector<1x32xf32> to vector<32xf32>
      %93 = vector.shape_cast %92 : vector<32xf32> to vector<1x32xf32>
      %94 = vector.broadcast %93 : vector<1x32xf32> to vector<16x32xf32>
      %95 = arith.addf %90, %94 : vector<16x32xf32>
      %c0_44 = arith.constant 0 : index
      %c0_45 = arith.constant 0 : index
      %c0_46 = arith.constant 0 : index
      %96 = vector.load %arg4[%c0_44, %c0_45, %c0_46] : memref<1x16x32xf32, #tpu.memory_space<vmem>>, vector<1x16x32xf32>
      %97 = vector.shape_cast %96 : vector<1x16x32xf32> to vector<16x32xf32>
      %c0_47 = arith.constant 0 : index
      %c0_48 = arith.constant 0 : index
      %98 = vector.load %arg9[%c0_47, %c0_48] : memref<32x32xf32, #tpu.memory_space<vmem>>, vector<32x32xf32>
      %cst_49 = arith.constant dense<0.000000e+00> : vector<16x32xf32>
      %99 = tpu.matmul %97, %98, %cst_49 {dimension_numbers = #tpu.dot_dimension_numbers<[1], [0], [0], [1], [0, 0, 1, 1], [], []>} : vector<16x32xf32>, vector<32x32xf32>, vector<16x32xf32> -> vector<16x32xf32>
      %c0_50 = arith.constant 0 : index
      %c0_51 = arith.constant 0 : index
      %100 = vector.load %arg10[%c0_50, %c0_51] : memref<1x32xf32, #tpu.memory_space<vmem>>, vector<1x32xf32>
      %101 = vector.shape_cast %100 : vector<1x32xf32> to vector<32xf32>
      %102 = vector.shape_cast %101 : vector<32xf32> to vector<1x32xf32>
      %103 = vector.broadcast %102 : vector<1x32xf32> to vector<16x32xf32>
      %104 = arith.addf %99, %103 : vector<16x32xf32>
      %c0_52 = arith.constant 0 : index
      %c0_53 = arith.constant 0 : index
      %105 = vector.load %arg14[%c0_52, %c0_53] : memref<16x32xf32, #tpu.memory_space<vmem>>, vector<16x32xf32>
      tpu.vector_store %arg14[%c0_52, %c0_53], %95 {strides = array<i32>} : memref<16x32xf32, #tpu.memory_space<vmem>>, vector<16x32xf32>,
      %c0_54 = arith.constant 0 : index
      %c0_55 = arith.constant 0 : index
      %106 = vector.load %arg15[%c0_54, %c0_55] : memref<16x32xf32, #tpu.memory_space<vmem>>, vector<16x32xf32>
      tpu.vector_store %arg15[%c0_54, %c0_55], %104 {strides = array<i32>} : memref<16x32xf32, #tpu.memory_space<vmem>>, vector<16x32xf32>,
    } else {
    }
    %c0 = arith.constant 0 : index
    %c0_1 = arith.constant 0 : index
    %c0_2 = arith.constant 0 : index
    %3 = vector.load %arg2[%c0, %c0_1, %c0_2] : memref<1x8x32xf32, #tpu.memory_space<vmem>>, vector<1x8x32xf32>
    %4 = vector.shape_cast %3 : vector<1x8x32xf32> to vector<8x32xf32>
    %c0_3 = arith.constant 0 : index
    %c0_4 = arith.constant 0 : index
    %5 = vector.load %arg5[%c0_3, %c0_4] : memref<32x32xf32, #tpu.memory_space<vmem>>, vector<32x32xf32>
    %cst = arith.constant dense<0.000000e+00> : vector<8x32xf32>
    %6 = tpu.matmul %4, %5, %cst {dimension_numbers = #tpu.dot_dimension_numbers<[1], [0], [0], [1], [0, 0, 1, 1], [], []>} : vector<8x32xf32>, vector<32x32xf32>, vector<8x32xf32> -> vector<8x32xf32>
    %c0_5 = arith.constant 0 : index
    %c0_6 = arith.constant 0 : index
    %7 = vector.load %arg6[%c0_5, %c0_6] : memref<1x32xf32, #tpu.memory_space<vmem>>, vector<1x32xf32>
    %8 = vector.shape_cast %7 : vector<1x32xf32> to vector<32xf32>
    %9 = vector.shape_cast %8 : vector<32xf32> to vector<1x32xf32>
    %10 = vector.broadcast %9 : vector<1x32xf32> to vector<8x32xf32>
    %11 = arith.addf %6, %10 : vector<8x32xf32>
    %cst_7 = arith.constant 0.353553385 : f32
    %12 = vector.broadcast %cst_7 : f32 to vector<8x32xf32>
    %13 = arith.mulf %11, %12 : vector<8x32xf32>
    %c0_8 = arith.constant 0 : index
    %c0_9 = arith.constant 0 : index
    %14 = vector.load %arg14[%c0_8, %c0_9] : memref<16x32xf32, #tpu.memory_space<vmem>>, vector<16x32xf32>
    %c0_10 = arith.constant 0 : index
    %c0_11 = arith.constant 0 : index
    %15 = vector.load %arg15[%c0_10, %c0_11] : memref<16x32xf32, #tpu.memory_space<vmem>>, vector<16x32xf32>
    %16 = vector.extract_strided_slice %13 {offsets = [0, 0], sizes = [8, 8], strides = [1, 1]} : vector<8x32xf32> to vector<8x8xf32>
    %17 = vector.extract_strided_slice %14 {offsets = [0, 0], sizes = [16, 8], strides = [1, 1]} : vector<16x32xf32> to vector<16x8xf32>
    %18 = vector.extract_strided_slice %15 {offsets = [0, 0], sizes = [16, 8], strides = [1, 1]} : vector<16x32xf32> to vector<16x8xf32>
    %cst_12 = arith.constant dense<0.000000e+00> : vector<8x16xf32>
    %19 = tpu.matmul %16, %17, %cst_12 {dimension_numbers = #tpu.dot_dimension_numbers<[1], [1], [0], [0], [0, 0, 1, 0], [], []>} : vector<8x8xf32>, vector<16x8xf32>, vector<8x16xf32> -> vector<8x16xf32>
    %cst_13 = arith.constant dense<0xFF800000> : vector<8xf32>
    %20 = vector.multi_reduction <maximumf>, %19, %cst_13 [1] : vector<8x16xf32> to vector<8xf32>
    %21 = vector.shape_cast %20 : vector<8xf32> to vector<8x1xf32>
    %22 = vector.broadcast %21 : vector<8x1xf32> to vector<8x16xf32>
    %23 = arith.subf %19, %22 : vector<8x16xf32>
    %24 = math.exp %23 : vector<8x16xf32>
    %cst_14 = arith.constant dense<0.000000e+00> : vector<8xf32>
    %25 = vector.multi_reduction <add>, %24, %cst_14 [1] : vector<8x16xf32> to vector<8xf32>
    %26 = vector.shape_cast %25 : vector<8xf32> to vector<8x1xf32>
    %27 = tpu.reciprocal %26 {approx = true} : vector<8x1xf32> -> vector<8x1xf32>
    %28 = vector.broadcast %27 : vector<8x1xf32> to vector<8x16xf32>
    %29 = arith.mulf %24, %28 : vector<8x16xf32>
    %cst_15 = arith.constant dense<0.000000e+00> : vector<8x8xf32>
    %30 = tpu.matmul %29, %18, %cst_15 {dimension_numbers = #tpu.dot_dimension_numbers<[1], [0], [0], [1], [0, 0, 1, 1], [], []>} : vector<8x16xf32>, vector<16x8xf32>, vector<8x8xf32> -> vector<8x8xf32>
    %31 = vector.extract_strided_slice %13 {offsets = [0, 8], sizes = [8, 8], strides = [1, 1]} : vector<8x32xf32> to vector<8x8xf32>
    %32 = vector.extract_strided_slice %14 {offsets = [0, 8], sizes = [16, 8], strides = [1, 1]} : vector<16x32xf32> to vector<16x8xf32>
    %33 = vector.extract_strided_slice %15 {offsets = [0, 8], sizes = [16, 8], strides = [1, 1]} : vector<16x32xf32> to vector<16x8xf32>
    %cst_16 = arith.constant dense<0.000000e+00> : vector<8x16xf32>
    %34 = tpu.matmul %31, %32, %cst_16 {dimension_numbers = #tpu.dot_dimension_numbers<[1], [1], [0], [0], [0, 0, 1, 0], [], []>} : vector<8x8xf32>, vector<16x8xf32>, vector<8x16xf32> -> vector<8x16xf32>
    %cst_17 = arith.constant dense<0xFF800000> : vector<8xf32>
    %35 = vector.multi_reduction <maximumf>, %34, %cst_17 [1] : vector<8x16xf32> to vector<8xf32>
    %36 = vector.shape_cast %35 : vector<8xf32> to vector<8x1xf32>
    %37 = vector.broadcast %36 : vector<8x1xf32> to vector<8x16xf32>
    %38 = arith.subf %34, %37 : vector<8x16xf32>
    %39 = math.exp %38 : vector<8x16xf32>
    %cst_18 = arith.constant dense<0.000000e+00> : vector<8xf32>
    %40 = vector.multi_reduction <add>, %39, %cst_18 [1] : vector<8x16xf32> to vector<8xf32>
    %41 = vector.shape_cast %40 : vector<8xf32> to vector<8x1xf32>
    %42 = tpu.reciprocal %41 {approx = true} : vector<8x1xf32> -> vector<8x1xf32>
    %43 = vector.broadcast %42 : vector<8x1xf32> to vector<8x16xf32>
    %44 = arith.mulf %39, %43 : vector<8x16xf32>
    %cst_19 = arith.constant dense<0.000000e+00> : vector<8x8xf32>
    %45 = tpu.matmul %44, %33, %cst_19 {dimension_numbers = #tpu.dot_dimension_numbers<[1], [0], [0], [1], [0, 0, 1, 1], [], []>} : vector<8x16xf32>, vector<16x8xf32>, vector<8x8xf32> -> vector<8x8xf32>
    %46 = vector.extract_strided_slice %13 {offsets = [0, 16], sizes = [8, 8], strides = [1, 1]} : vector<8x32xf32> to vector<8x8xf32>
    %47 = vector.extract_strided_slice %14 {offsets = [0, 16], sizes = [16, 8], strides = [1, 1]} : vector<16x32xf32> to vector<16x8xf32>
    %48 = vector.extract_strided_slice %15 {offsets = [0, 16], sizes = [16, 8], strides = [1, 1]} : vector<16x32xf32> to vector<16x8xf32>
    %cst_20 = arith.constant dense<0.000000e+00> : vector<8x16xf32>
    %49 = tpu.matmul %46, %47, %cst_20 {dimension_numbers = #tpu.dot_dimension_numbers<[1], [1], [0], [0], [0, 0, 1, 0], [], []>} : vector<8x8xf32>, vector<16x8xf32>, vector<8x16xf32> -> vector<8x16xf32>
    %cst_21 = arith.constant dense<0xFF800000> : vector<8xf32>
    %50 = vector.multi_reduction <maximumf>, %49, %cst_21 [1] : vector<8x16xf32> to vector<8xf32>
    %51 = vector.shape_cast %50 : vector<8xf32> to vector<8x1xf32>
    %52 = vector.broadcast %51 : vector<8x1xf32> to vector<8x16xf32>
    %53 = arith.subf %49, %52 : vector<8x16xf32>
    %54 = math.exp %53 : vector<8x16xf32>
    %cst_22 = arith.constant dense<0.000000e+00> : vector<8xf32>
    %55 = vector.multi_reduction <add>, %54, %cst_22 [1] : vector<8x16xf32> to vector<8xf32>
    %56 = vector.shape_cast %55 : vector<8xf32> to vector<8x1xf32>
    %57 = tpu.reciprocal %56 {approx = true} : vector<8x1xf32> -> vector<8x1xf32>
    %58 = vector.broadcast %57 : vector<8x1xf32> to vector<8x16xf32>
    %59 = arith.mulf %54, %58 : vector<8x16xf32>
    %cst_23 = arith.constant dense<0.000000e+00> : vector<8x8xf32>
    %60 = tpu.matmul %59, %48, %cst_23 {dimension_numbers = #tpu.dot_dimension_numbers<[1], [0], [0], [1], [0, 0, 1, 1], [], []>} : vector<8x16xf32>, vector<16x8xf32>, vector<8x8xf32> -> vector<8x8xf32>
    %61 = vector.extract_strided_slice %13 {offsets = [0, 24], sizes = [8, 8], strides = [1, 1]} : vector<8x32xf32> to vector<8x8xf32>
    %62 = vector.extract_strided_slice %14 {offsets = [0, 24], sizes = [16, 8], strides = [1, 1]} : vector<16x32xf32> to vector<16x8xf32>
    %63 = vector.extract_strided_slice %15 {offsets = [0, 24], sizes = [16, 8], strides = [1, 1]} : vector<16x32xf32> to vector<16x8xf32>
    %cst_24 = arith.constant dense<0.000000e+00> : vector<8x16xf32>
    %64 = tpu.matmul %61, %62, %cst_24 {dimension_numbers = #tpu.dot_dimension_numbers<[1], [1], [0], [0], [0, 0, 1, 0], [], []>} : vector<8x8xf32>, vector<16x8xf32>, vector<8x16xf32> -> vector<8x16xf32>
    %cst_25 = arith.constant dense<0xFF800000> : vector<8xf32>
    %65 = vector.multi_reduction <maximumf>, %64, %cst_25 [1] : vector<8x16xf32> to vector<8xf32>
    %66 = vector.shape_cast %65 : vector<8xf32> to vector<8x1xf32>
    %67 = vector.broadcast %66 : vector<8x1xf32> to vector<8x16xf32>
    %68 = arith.subf %64, %67 : vector<8x16xf32>
    %69 = math.exp %68 : vector<8x16xf32>
    %cst_26 = arith.constant dense<0.000000e+00> : vector<8xf32>
    %70 = vector.multi_reduction <add>, %69, %cst_26 [1] : vector<8x16xf32> to vector<8xf32>
    %71 = vector.shape_cast %70 : vector<8xf32> to vector<8x1xf32>
    %72 = tpu.reciprocal %71 {approx = true} : vector<8x1xf32> -> vector<8x1xf32>
    %73 = vector.broadcast %72 : vector<8x1xf32> to vector<8x16xf32>
    %74 = arith.mulf %69, %73 : vector<8x16xf32>
    %cst_27 = arith.constant dense<0.000000e+00> : vector<8x8xf32>
    %75 = tpu.matmul %74, %63, %cst_27 {dimension_numbers = #tpu.dot_dimension_numbers<[1], [0], [0], [1], [0, 0, 1, 1], [], []>} : vector<8x16xf32>, vector<16x8xf32>, vector<8x8xf32> -> vector<8x8xf32>
    %76 = tpu.concatenate %30, %45, %60, %75 in 1 : vector<8x8xf32>, vector<8x8xf32>, vector<8x8xf32>, vector<8x8xf32> -> vector<8x32xf32>
    %c0_28 = arith.constant 0 : index
    %c0_29 = arith.constant 0 : index
    %77 = vector.load %arg11[%c0_28, %c0_29] : memref<32x32xf32, #tpu.memory_space<vmem>>, vector<32x32xf32>
    %cst_30 = arith.constant dense<0.000000e+00> : vector<8x32xf32>
    %78 = tpu.matmul %76, %77, %cst_30 {dimension_numbers = #tpu.dot_dimension_numbers<[1], [0], [0], [1], [0, 0, 1, 1], [], []>} : vector<8x32xf32>, vector<32x32xf32>, vector<8x32xf32> -> vector<8x32xf32>
    %c0_31 = arith.constant 0 : index
    %c0_32 = arith.constant 0 : index
    %79 = vector.load %arg12[%c0_31, %c0_32] : memref<1x32xf32, #tpu.memory_space<vmem>>, vector<1x32xf32>
    %80 = vector.shape_cast %79 : vector<1x32xf32> to vector<32xf32>
    %81 = vector.shape_cast %80 : vector<32xf32> to vector<1x32xf32>
    %82 = vector.broadcast %81 : vector<1x32xf32> to vector<8x32xf32>
    %83 = arith.addf %78, %82 : vector<8x32xf32>
    %c0_33 = arith.constant 0 : index
    %c0_34 = arith.constant 0 : index
    %c0_35 = arith.constant 0 : index
    %84 = vector.load %arg13[%c0_33, %c0_34, %c0_35] : memref<1x8x32xf32, #tpu.memory_space<vmem>>, vector<1x8x32xf32>
    %85 = vector.shape_cast %84 : vector<1x8x32xf32> to vector<8x32xf32>
    %86 = vector.shape_cast %83 : vector<8x32xf32> to vector<1x8x32xf32>
    tpu.vector_store %arg13[%c0_33, %c0_34, %c0_35], %86 {strides = array<i32>} : memref<1x8x32xf32, #tpu.memory_space<vmem>>, vector<1x8x32xf32>,
    return
  }
  func.func @transform_0(%arg0: i32, %arg1: i32) -> (i32, i32, i32) {
    %c0_i32 = arith.constant 0 : i32
    %c0_i32_0 = arith.constant 0 : i32
    return %arg0, %arg1, %c0_i32 : i32, i32, i32
  }
  func.func @transform_1(%arg0: i32, %arg1: i32) -> (i32, i32, i32) {
    %c0_i32 = arith.constant 0 : i32
    %c0_i32_0 = arith.constant 0 : i32
    %c0_i32_1 = arith.constant 0 : i32
    return %arg0, %c0_i32, %c0_i32_0 : i32, i32, i32
  }
  func.func @transform_2(%arg0: i32, %arg1: i32) -> (i32, i32, i32) {
    %c0_i32 = arith.constant 0 : i32
    %c0_i32_0 = arith.constant 0 : i32
    %c0_i32_1 = arith.constant 0 : i32
    return %arg0, %c0_i32, %c0_i32_0 : i32, i32, i32
  }
  func.func @transform_3(%arg0: i32, %arg1: i32) -> (i32, i32) {
    %c0_i32 = arith.constant 0 : i32
    %c0_i32_0 = arith.constant 0 : i32
    %c0_i32_1 = arith.constant 0 : i32
    return %c0_i32, %c0_i32_0 : i32, i32
  }
  func.func @transform_4(%arg0: i32, %arg1: i32) -> (i32, i32) {
    %c0_i32 = arith.constant 0 : i32
    %c0_i32_0 = arith.constant 0 : i32
    %c0_i32_1 = arith.constant 0 : i32
    return %c0_i32, %c0_i32_0 : i32, i32
  }
  func.func @transform_5(%arg0: i32, %arg1: i32) -> (i32, i32) {
    %c0_i32 = arith.constant 0 : i32
    %c0_i32_0 = arith.constant 0 : i32
    %c0_i32_1 = arith.constant 0 : i32
    return %c0_i32, %c0_i32_0 : i32, i32
  }
  func.func @transform_6(%arg0: i32, %arg1: i32) -> (i32, i32) {
    %c0_i32 = arith.constant 0 : i32
    %c0_i32_0 = arith.constant 0 : i32
    %c0_i32_1 = arith.constant 0 : i32
    return %c0_i32, %c0_i32_0 : i32, i32
  }
  func.func @transform_7(%arg0: i32, %arg1: i32) -> (i32, i32) {
    %c0_i32 = arith.constant 0 : i32
    %c0_i32_0 = arith.constant 0 : i32
    %c0_i32_1 = arith.constant 0 : i32
    return %c0_i32, %c0_i32_0 : i32, i32
  }
  func.func @transform_8(%arg0: i32, %arg1: i32) -> (i32, i32) {
    %c0_i32 = arith.constant 0 : i32
    %c0_i32_0 = arith.constant 0 : i32
    %c0_i32_1 = arith.constant 0 : i32
    return %c0_i32, %c0_i32_0 : i32, i32
  }
  func.func @transform_9(%arg0: i32, %arg1: i32) -> (i32, i32) {
    %c0_i32 = arith.constant 0 : i32
    %c0_i32_0 = arith.constant 0 : i32
    %c0_i32_1 = arith.constant 0 : i32
    return %c0_i32, %c0_i32_0 : i32, i32
  }
  func.func @transform_10(%arg0: i32, %arg1: i32) -> (i32, i32) {
    %c0_i32 = arith.constant 0 : i32
    %c0_i32_0 = arith.constant 0 : i32
    %c0_i32_1 = arith.constant 0 : i32
    return %c0_i32, %c0_i32_0 : i32, i32
  }
  func.func @transform_11(%arg0: i32, %arg1: i32) -> (i32, i32, i32) {
    %c0_i32 = arith.constant 0 : i32
    %c0_i32_0 = arith.constant 0 : i32
    return %arg0, %arg1, %c0_i32 : i32, i32, i32
  }
}

</mosaic_0001>

<llo_original>
// kernel: tpu_custom_call.1
$region0: #{tpu_custom_call.1}
  #allocation0 [shape = 'u32[]', space=smem, size = 0x4, offset = 0x4, fixed_abs, tag = 'smem constant byte address 0x4 - core index']
  #allocation1 [shape = 'u32[144,128]{1,0:T(1,128)}', space=vmem, size = 0x12000, scoped, tag = 'internal scratch']
  #allocation2 [shape = 'f32[16,32]{1,0:T(8,128)}', space=vmem, size = 0x2000, scoped, tag = 'scratch operand']
  #allocation3 [shape = 'f32[16,32]{1,0:T(8,128)}', space=vmem, size = 0x2000, scoped, tag = 'scratch operand']
  %s0 = inlined_call_operand.hbm [shape: f32[2,16,32], index: 0, kind: input, shape index: {}]
  %s1 = inlined_call_operand.hbm [shape: f32[2,16,32], index: 1, kind: input, shape index: {}]
  %s2 = inlined_call_operand.hbm [shape: f32[2,16,32], index: 2, kind: input, shape index: {}]
  %s3 = inlined_call_operand.hbm [shape: f32[32,32], index: 3, kind: input, shape index: {}]
  %s4 = inlined_call_operand.hbm [shape: f32[1,32], index: 4, kind: input, shape index: {}]
  %s5 = inlined_call_operand.hbm [shape: f32[32,32], index: 5, kind: input, shape index: {}]
  %s6 = inlined_call_operand.hbm [shape: f32[1,32], index: 6, kind: input, shape index: {}]
  %s7 = inlined_call_operand.hbm [shape: f32[32,32], index: 7, kind: input, shape index: {}]
  %s8 = inlined_call_operand.hbm [shape: f32[1,32], index: 8, kind: input, shape index: {}]
  %s9 = inlined_call_operand.hbm [shape: f32[32,32], index: 9, kind: input, shape index: {}]
  %s10 = inlined_call_operand.hbm [shape: f32[1,32], index: 10, kind: input, shape index: {}]
  %s11 = inlined_call_operand.hbm [shape: f32[2,16,32], index: 11, kind: output, shape index: {}]
  %s12 = sld [smem:[#allocation0]]
  $region125: #{tpu_custom_call.1} parent=0
    _
  %s14 = ssub.s32 1, %s12
  %s15 = scalar_select 0, %s14, %s12
  $region1: #{tpu_custom_call.1} parent=0
    #allocation4 [shape = 'u8[8192]{0}', space=vmem, size = 0x2000, scoped, tag = 'input window, operand 0']
    #allocation5 [shape = 's32[2]{0}', space=sflag, size = 0x8, scoped, tag = 'scoped memory for tpu_custom_call.1']
    #allocation6 [shape = 's32[2]{0}', space=sflag, size = 0x8, scoped, tag = 'scoped memory for tpu_custom_call.1']
    #allocation7 [shape = 'u8[16384]{0}', space=vmem, size = 0x4000, scoped, tag = 'input window, operand 1']
    #allocation8 [shape = 's32[2]{0}', space=sflag, size = 0x8, scoped, tag = 'scoped memory for tpu_custom_call.1']
    #allocation9 [shape = 'u8[16384]{0}', space=vmem, size = 0x4000, scoped, tag = 'input window, operand 2']
    #allocation10 [shape = 'u8[16384]{0}', space=vmem, size = 0x4000, scoped, tag = 'input window, operand 3, single buffered']
    #allocation11 [shape = 's32[1]{0}', space=sflag, size = 0x4, scoped, tag = 'scoped memory for tpu_custom_call.1']
    #allocation12 [shape = 'u8[512]{0}', space=vmem, size = 0x400, scoped, tag = 'input window, operand 4, single buffered']
    #allocation13 [shape = 'u8[16384]{0}', space=vmem, size = 0x4000, scoped, tag = 'input window, operand 5, single buffered']
    #allocation14 [shape = 's32[1]{0}', space=sflag, size = 0x4, scoped, tag = 'scoped memory for tpu_custom_call.1']
    #allocation15 [shape = 'u8[512]{0}', space=vmem, size = 0x400, scoped, tag = 'input window, operand 6, single buffered']
    #allocation16 [shape = 'u8[16384]{0}', space=vmem, size = 0x4000, scoped, tag = 'input window, operand 7, single buffered']
    #allocation17 [shape = 's32[1]{0}', space=sflag, size = 0x4, scoped, tag = 'scoped memory for tpu_custom_call.1']
    #allocation18 [shape = 'u8[512]{0}', space=vmem, size = 0x400, scoped, tag = 'input window, operand 8, single buffered']
    #allocation19 [shape = 'u8[16384]{0}', space=vmem, size = 0x4000, scoped, tag = 'input window, operand 9, single buffered']
    #allocation20 [shape = 's32[1]{0}', space=sflag, size = 0x4, scoped, tag = 'scoped memory for tpu_custom_call.1']
    #allocation21 [shape = 'u8[512]{0}', space=vmem, size = 0x400, scoped, tag = 'input window, operand 10, single buffered']
    #allocation22 [shape = 'u8[8192]{0}', space=vmem, size = 0x2000, scoped, tag = 'output window, operand 0']
    %16 = vsyncpa [#allocation5], 0
    %s17 = scalar_lea.sflag [#allocation5], 1
    %18 = vsyncpa %s17, 0
    %19 = vsyncpa [#allocation8], 0
    %s20 = scalar_lea.sflag [#allocation8], 1
    %21 = vsyncpa %s20, 0
    %22 = vsyncpa [#allocation11], 0
    %23 = vsyncpa [#allocation14], 0
    %24 = vsyncpa [#allocation17], 0
    %25 = vsyncpa [#allocation20], 0
    %26 = vsyncpa [#allocation6], 0
    %s27 = scalar_lea.sflag [#allocation6], 1
    %28 = vsyncpa %s27, 0
    loop: start=0, step=1, limit=6
    $region2: #{tpu_custom_call.1} parent=1 // loop_pre_header
      _
    $region3: #{tpu_custom_call.1} parent=1 // loop_header
      %s30 = sphi 0, %s34
      %p31 = scmp.ge.s32.totalorder %s30, 6
      %s37 = sphi 0, %s49
      %s38 = sphi 0, %s45
      %s39 = sphi 0, %s37
      %s40 = sphi 0, %s38
      %s41 = sphi 0, %s39
      %s42 = sphi 0, %s40
      %s54 = sphi 0, %s56
      %s57 = sphi 0, %s54
      %s58 = sphi 0, %s57
      %s74 = sphi 0, %s58
      %s80 = sphi 0, %s82
      %s83 = sphi 0, %s80
      %s84 = sphi 0, %s83
      %s100 = sphi 0, %s84
      %s106 = sphi 0, %s108
      %s109 = sphi 0, %s106
      %s110 = sphi 0, %s109
      %s126 = sphi 0, %s110
      %s130 = sphi 0, %s130
      %s132 = sphi 0, %s130
      %s133 = sphi 0, %s132
      %s147 = sphi 0, %s133
      %s151 = sphi 0, %s151
      %s153 = sphi 0, %s151
      %s154 = sphi 0, %s153
      %s168 = sphi 0, %s154
      %s172 = sphi 0, %s172
      %s174 = sphi 0, %s172
      %s175 = sphi 0, %s174
      %s189 = sphi 0, %s175
      %s193 = sphi 0, %s193
      %s195 = sphi 0, %s193
      %s196 = sphi 0, %s195
      %s210 = sphi 0, %s196
      %s214 = sphi 0, %s214
      %s216 = sphi 0, %s214
      %s217 = sphi 0, %s216
      %s231 = sphi 0, %s217
      %s235 = sphi 0, %s235
      %s237 = sphi 0, %s235
      %s238 = sphi 0, %s237
      %s252 = sphi 0, %s238
      %s256 = sphi 0, %s256
      %s258 = sphi 0, %s256
      %s259 = sphi 0, %s258
      %s273 = sphi 0, %s259
      %s277 = sphi 0, %s277
      %s279 = sphi 0, %s277
      %s280 = sphi 0, %s279
      %s294 = sphi 0, %s280
      %s302 = sphi 0, %s304
      %s305 = sphi 0, %s302
      %s306 = sphi 0, %s305
      %s322 = sphi 0, %s306
    $region4: #{tpu_custom_call.1} parent=1 // loop_header_branch
      %33 = sbr.rel (%p31) target = $region8
    $region5: #{tpu_custom_call.1} parent=1 // loop_body
      %s35 = ssub.s32 %s30, 1
      %s36 = ssub.s32 %s30, 2
      %s43 = sadd.s32 1, %s38
      %p44 = scmp.ge.s32.totalorder %s43, 2
      %s45 = scalar_select %p44, 0, %s43
      %s46 = sadd.s32 1, %s37
      %s47 = scalar_select %p44, %s46, %s37
      %p48 = scmp.ge.s32.totalorder %s47, 2
      %s49 = scalar_select %p48, 0, %s47
      %s50 = ssub.s32 %s37, %s49
      %s51 = ssub.s32 %s38, %s45
      %s52 = sor.u32 %s50, %s51
      %p53 = scmp.eq.s32.totalorder %s52, 0
      %s55 = sadd.s32 %s54, 1
      %s56 = scalar_select %p53, %s54, %s55
      %p59 = pneg %p53
      %p60 = scmp.eq.s32.totalorder %s30, 3
      %p61 = por %p59, %p60
      %p62 = scmp.ne.s32.totalorder %s54, %s57
      %p63 = scmp.eq.s32.totalorder %s30, 0
      %p64 = por %p62, %p63
      %p65 = scmp.ne.s32.totalorder %s54, %s57
      %p66 = scmp.eq.s32.totalorder %s35, 3
      %p67 = por %p65, %p66
      %p68 = scmp.ne.s32.totalorder %s57, %s58
      %p69 = scmp.eq.s32.totalorder %s35, 0
      %p70 = por %p68, %p69
      %p71 = scmp.ne.s32.totalorder %s57, %s58
      %p72 = scmp.eq.s32.totalorder %s36, 3
      %p73 = por %p71, %p72
      %p75 = scmp.ne.s32.totalorder %s58, %s74
      %p76 = scmp.eq.s32.totalorder %s36, 0
      %p77 = por %p75, %p76
      %s78 = ssub.s32 %s37, %s49
      %p79 = scmp.eq.s32.totalorder %s78, 0
      %s81 = sadd.s32 %s80, 1
      %s82 = scalar_select %p79, %s80, %s81
      %p85 = pneg %p79
      %p86 = scmp.eq.s32.totalorder %s30, 3
      %p87 = por %p85, %p86
      %p88 = scmp.ne.s32.totalorder %s80, %s83
      %p89 = scmp.eq.s32.totalorder %s30, 0
      %p90 = por %p88, %p89
      %p91 = scmp.ne.s32.totalorder %s80, %s83
      %p92 = scmp.eq.s32.totalorder %s35, 3
      %p93 = por %p91, %p92
      %p94 = scmp.ne.s32.totalorder %s83, %s84
      %p95 = scmp.eq.s32.totalorder %s35, 0
      %p96 = por %p94, %p95
      %p97 = scmp.ne.s32.totalorder %s83, %s84
      %p98 = scmp.eq.s32.totalorder %s36, 3
      %p99 = por %p97, %p98
      %p101 = scmp.ne.s32.totalorder %s84, %s100
      %p102 = scmp.eq.s32.totalorder %s36, 0
      %p103 = por %p101, %p102
      %s104 = ssub.s32 %s37, %s49
      %p105 = scmp.eq.s32.totalorder %s104, 0
      %s107 = sadd.s32 %s106, 1
      %s108 = scalar_select %p105, %s106, %s107
      %p111 = pneg %p105
      %p112 = scmp.eq.s32.totalorder %s30, 3
      %p113 = por %p111, %p112
      %p114 = scmp.ne.s32.totalorder %s106, %s109
      %p115 = scmp.eq.s32.totalorder %s30, 0
      %p116 = por %p114, %p115
      %p117 = scmp.ne.s32.totalorder %s106, %s109
      %p118 = scmp.eq.s32.totalorder %s35, 3
      %p119 = por %p117, %p118
      %p120 = scmp.ne.s32.totalorder %s109, %s110
      %p121 = scmp.eq.s32.totalorder %s35, 0
      %p122 = por %p120, %p121
      %p123 = scmp.ne.s32.totalorder %s109, %s110
      %p124 = scmp.eq.s32.totalorder %s36, 3
      %p125 = por %p123, %p124
      %p127 = scmp.ne.s32.totalorder %s110, %s126
      %p128 = scmp.eq.s32.totalorder %s36, 0
      %p129 = por %p127, %p128
      %s131 = sadd.s32 %s130, 1
      %p134 = scmp.eq.s32.totalorder %s30, 3
      %p135 = scmp.ne.s32.totalorder %s130, %s132
      %p136 = scmp.eq.s32.totalorder %s30, 0
      %p137 = por %p135, %p136
      %p138 = scmp.ne.s32.totalorder %s130, %s132
      %p139 = scmp.eq.s32.totalorder %s35, 3
      %p140 = por %p138, %p139
      %p141 = scmp.ne.s32.totalorder %s132, %s133
      %p142 = scmp.eq.s32.totalorder %s35, 0
      %p143 = por %p141, %p142
      %p144 = scmp.ne.s32.totalorder %s132, %s133
      %p145 = scmp.eq.s32.totalorder %s36, 3
      %p146 = por %p144, %p145
      %p148 = scmp.ne.s32.totalorder %s133, %s147
      %p149 = scmp.eq.s32.totalorder %s36, 0
      %p150 = por %p148, %p149
      %s152 = sadd.s32 %s151, 1
      %p155 = scmp.eq.s32.totalorder %s30, 3
      %p156 = scmp.ne.s32.totalorder %s151, %s153
      %p157 = scmp.eq.s32.totalorder %s30, 0
      %p158 = por %p156, %p157
      %p159 = scmp.ne.s32.totalorder %s151, %s153
      %p160 = scmp.eq.s32.totalorder %s35, 3
      %p161 = por %p159, %p160
      %p162 = scmp.ne.s32.totalorder %s153, %s154
      %p163 = scmp.eq.s32.totalorder %s35, 0
      %p164 = por %p162, %p163
      %p165 = scmp.ne.s32.totalorder %s153, %s154
      %p166 = scmp.eq.s32.totalorder %s36, 3
      %p167 = por %p165, %p166
      %p169 = scmp.ne.s32.totalorder %s154, %s168
      %p170 = scmp.eq.s32.totalorder %s36, 0
      %p171 = por %p169, %p170
      %s173 = sadd.s32 %s172, 1
      %p176 = scmp.eq.s32.totalorder %s30, 3
      %p177 = scmp.ne.s32.totalorder %s172, %s174
      %p178 = scmp.eq.s32.totalorder %s30, 0
      %p179 = por %p177, %p178
      %p180 = scmp.ne.s32.totalorder %s172, %s174
      %p181 = scmp.eq.s32.totalorder %s35, 3
      %p182 = por %p180, %p181
      %p183 = scmp.ne.s32.totalorder %s174, %s175
      %p184 = scmp.eq.s32.totalorder %s35, 0
      %p185 = por %p183, %p184
      %p186 = scmp.ne.s32.totalorder %s174, %s175
      %p187 = scmp.eq.s32.totalorder %s36, 3
      %p188 = por %p186, %p187
      %p190 = scmp.ne.s32.totalorder %s175, %s189
      %p191 = scmp.eq.s32.totalorder %s36, 0
      %p192 = por %p190, %p191
      %s194 = sadd.s32 %s193, 1
      %p197 = scmp.eq.s32.totalorder %s30, 3
      %p198 = scmp.ne.s32.totalorder %s193, %s195
      %p199 = scmp.eq.s32.totalorder %s30, 0
      %p200 = por %p198, %p199
      %p201 = scmp.ne.s32.totalorder %s193, %s195
      %p202 = scmp.eq.s32.totalorder %s35, 3
      %p203 = por %p201, %p202
      %p204 = scmp.ne.s32.totalorder %s195, %s196
      %p205 = scmp.eq.s32.totalorder %s35, 0
      %p206 = por %p204, %p205
      %p207 = scmp.ne.s32.totalorder %s195, %s196
      %p208 = scmp.eq.s32.totalorder %s36, 3
      %p209 = por %p207, %p208
      %p211 = scmp.ne.s32.totalorder %s196, %s210
      %p212 = scmp.eq.s32.totalorder %s36, 0
      %p213 = por %p211, %p212
      %s215 = sadd.s32 %s214, 1
      %p218 = scmp.eq.s32.totalorder %s30, 3
      %p219 = scmp.ne.s32.totalorder %s214, %s216
      %p220 = scmp.eq.s32.totalorder %s30, 0
      %p221 = por %p219, %p220
      %p222 = scmp.ne.s32.totalorder %s214, %s216
      %p223 = scmp.eq.s32.totalorder %s35, 3
      %p224 = por %p222, %p223
      %p225 = scmp.ne.s32.totalorder %s216, %s217
      %p226 = scmp.eq.s32.totalorder %s35, 0
      %p227 = por %p225, %p226
      %p228 = scmp.ne.s32.totalorder %s216, %s217
      %p229 = scmp.eq.s32.totalorder %s36, 3
      %p230 = por %p228, %p229
      %p232 = scmp.ne.s32.totalorder %s217, %s231
      %p233 = scmp.eq.s32.totalorder %s36, 0
      %p234 = por %p232, %p233
      %s236 = sadd.s32 %s235, 1
      %p239 = scmp.eq.s32.totalorder %s30, 3
      %p240 = scmp.ne.s32.totalorder %s235, %s237
      %p241 = scmp.eq.s32.totalorder %s30, 0
      %p242 = por %p240, %p241
      %p243 = scmp.ne.s32.totalorder %s235, %s237
      %p244 = scmp.eq.s32.totalorder %s35, 3
      %p245 = por %p243, %p244
      %p246 = scmp.ne.s32.totalorder %s237, %s238
      %p247 = scmp.eq.s32.totalorder %s35, 0
      %p248 = por %p246, %p247
      %p249 = scmp.ne.s32.totalorder %s237, %s238
      %p250 = scmp.eq.s32.totalorder %s36, 3
      %p251 = por %p249, %p250
      %p253 = scmp.ne.s32.totalorder %s238, %s252
      %p254 = scmp.eq.s32.totalorder %s36, 0
      %p255 = por %p253, %p254
      %s257 = sadd.s32 %s256, 1
      %p260 = scmp.eq.s32.totalorder %s30, 3
      %p261 = scmp.ne.s32.totalorder %s256, %s258
      %p262 = scmp.eq.s32.totalorder %s30, 0
      %p263 = por %p261, %p262
      %p264 = scmp.ne.s32.totalorder %s256, %s258
      %p265 = scmp.eq.s32.totalorder %s35, 3
      %p266 = por %p264, %p265
      %p267 = scmp.ne.s32.totalorder %s258, %s259
      %p268 = scmp.eq.s32.totalorder %s35, 0
      %p269 = por %p267, %p268
      %p270 = scmp.ne.s32.totalorder %s258, %s259
      %p271 = scmp.eq.s32.totalorder %s36, 3
      %p272 = por %p270, %p271
      %p274 = scmp.ne.s32.totalorder %s259, %s273
      %p275 = scmp.eq.s32.totalorder %s36, 0
      %p276 = por %p274, %p275
      %s278 = sadd.s32 %s277, 1
      %p281 = scmp.eq.s32.totalorder %s30, 3
      %p282 = scmp.ne.s32.totalorder %s277, %s279
      %p283 = scmp.eq.s32.totalorder %s30, 0
      %p284 = por %p282, %p283
      %p285 = scmp.ne.s32.totalorder %s277, %s279
      %p286 = scmp.eq.s32.totalorder %s35, 3
      %p287 = por %p285, %p286
      %p288 = scmp.ne.s32.totalorder %s279, %s280
      %p289 = scmp.eq.s32.totalorder %s35, 0
      %p290 = por %p288, %p289
      %p291 = scmp.ne.s32.totalorder %s279, %s280
      %p292 = scmp.eq.s32.totalorder %s36, 3
      %p293 = por %p291, %p292
      %p295 = scmp.ne.s32.totalorder %s280, %s294
      %p296 = scmp.eq.s32.totalorder %s36, 0
      %p297 = por %p295, %p296
      %s298 = ssub.s32 %s37, %s49
      %s299 = ssub.s32 %s38, %s45
      %s300 = sor.u32 %s298, %s299
      %p301 = scmp.eq.s32.totalorder %s300, 0
      %s303 = sadd.s32 %s302, 1
      %s304 = scalar_select %p301, %s302, %s303
      %p307 = pneg %p301
      %p308 = scmp.eq.s32.totalorder %s30, 3
      %p309 = por %p307, %p308
      %p310 = scmp.ne.s32.totalorder %s302, %s305
      %p311 = scmp.eq.s32.totalorder %s30, 0
      %p312 = por %p310, %p311
      %p313 = scmp.ne.s32.totalorder %s302, %s305
      %p314 = scmp.eq.s32.totalorder %s35, 3
      %p315 = por %p313, %p314
      %p316 = scmp.ne.s32.totalorder %s305, %s306
      %p317 = scmp.eq.s32.totalorder %s35, 0
      %p318 = por %p316, %p317
      %p319 = scmp.ne.s32.totalorder %s305, %s306
      %p320 = scmp.eq.s32.totalorder %s36, 3
      %p321 = por %p319, %p320
      %p323 = scmp.ne.s32.totalorder %s306, %s322
      %p324 = scmp.eq.s32.totalorder %s36, 0
      %p325 = por %p323, %p324
      %p326 = scmp.le.s32.totalorder 1, %s30
      %p327 = scmp.lt.s32.totalorder %s30, 5
      %p328 = pnand %p326, %p327
      %p329 = pneg %p328
      // Predicated region
      $region9: #{tpu_custom_call.1} parent=5 // pred_check
        _
      $region10: #{tpu_custom_call.1} parent=5 // pred_check_branch
        %331 = sbr.rel (%p328) target = $region12
      $region11: #{tpu_custom_call.1} parent=5 // pred_region
        %s332 = ssub.s32 %s30, 1
        // Predicated region
        $region13: #{tpu_custom_call.1} parent=11 // pred_check
          %p333 = pneg %p143
        $region14: #{tpu_custom_call.1} parent=11 // pred_check_branch
          %335 = sbr.rel (%p333) target = $region16
        $region15: #{tpu_custom_call.1} parent=11 // pred_region
          %s337 = ssub.s32 512, 512
          %338 = vsyncadd [#allocation11], %s337
          %s339 = sshll.u32 [#allocation10], 4
          %s340 = int_to_ptr.vmem [resolvable:$true] %s339
          %345 = dma.hbm_to_vmem [thread:$0]  %s3, 512, %s340, [#allocation11], 128, 128, 8
        $region16: #{tpu_custom_call.1} parent=11 // pred_fallthru
          _
        // Predicated region
        $region17: #{tpu_custom_call.1} parent=11 // pred_check
          %p346 = pneg %p164
        $region18: #{tpu_custom_call.1} parent=11 // pred_check_branch
          %348 = sbr.rel (%p346) target = $region20
        $region19: #{tpu_custom_call.1} parent=11 // pred_region
          %s350 = ssub.s32 16, 16
          %351 = vsyncadd [#allocation11], %s350
          %s353 = sshll.u32 [#allocation12], 4
          %s354 = int_to_ptr.vmem [resolvable:$true] %s353
          %356 = dma.hbm_to_vmem [thread:$0]  %s4, 16, %s354, [#allocation11]
        $region20: #{tpu_custom_call.1} parent=11 // pred_fallthru
          _
        // Predicated region
        $region21: #{tpu_custom_call.1} parent=11 // pred_check
          %p357 = pneg %p185
        $region22: #{tpu_custom_call.1} parent=11 // pred_check_branch
          %359 = sbr.rel (%p357) target = $region24
        $region23: #{tpu_custom_call.1} parent=11 // pred_region
          %s361 = ssub.s32 512, 512
          %362 = vsyncadd [#allocation14], %s361
          %s363 = sshll.u32 [#allocation13], 4
          %s364 = int_to_ptr.vmem [resolvable:$true] %s363
          %369 = dma.hbm_to_vmem [thread:$0]  %s5, 512, %s364, [#allocation14], 128, 128, 8
        $region24: #{tpu_custom_call.1} parent=11 // pred_fallthru
          _
        // Predicated region
        $region25: #{tpu_custom_call.1} parent=11 // pred_check
          %p370 = pneg %p206
        $region26: #{tpu_custom_call.1} parent=11 // pred_check_branch
          %372 = sbr.rel (%p370) target = $region28
        $region27: #{tpu_custom_call.1} parent=11 // pred_region
          %s374 = ssub.s32 16, 16
          %375 = vsyncadd [#allocation14], %s374
          %s377 = sshll.u32 [#allocation15], 4
          %s378 = int_to_ptr.vmem [resolvable:$true] %s377
          %380 = dma.hbm_to_vmem [thread:$0]  %s6, 16, %s378, [#allocation14]
        $region28: #{tpu_custom_call.1} parent=11 // pred_fallthru
          _
        // Predicated region
        $region29: #{tpu_custom_call.1} parent=11 // pred_check
          %p381 = pneg %p227
        $region30: #{tpu_custom_call.1} parent=11 // pred_check_branch
          %383 = sbr.rel (%p381) target = $region32
        $region31: #{tpu_custom_call.1} parent=11 // pred_region
          %s385 = ssub.s32 512, 512
          %386 = vsyncadd [#allocation17], %s385
          %s387 = sshll.u32 [#allocation16], 4
          %s388 = int_to_ptr.vmem [resolvable:$true] %s387
          %393 = dma.hbm_to_vmem [thread:$0]  %s7, 512, %s388, [#allocation17], 128, 128, 8
        $region32: #{tpu_custom_call.1} parent=11 // pred_fallthru
          _
        // Predicated region
        $region33: #{tpu_custom_call.1} parent=11 // pred_check
          %p394 = pneg %p248
        $region34: #{tpu_custom_call.1} parent=11 // pred_check_branch
          %396 = sbr.rel (%p394) target = $region36
        $region35: #{tpu_custom_call.1} parent=11 // pred_region
          %s398 = ssub.s32 16, 16
          %399 = vsyncadd [#allocation17], %s398
          %s401 = sshll.u32 [#allocation18], 4
          %s402 = int_to_ptr.vmem [resolvable:$true] %s401
          %404 = dma.hbm_to_vmem [thread:$0]  %s8, 16, %s402, [#allocation17]
        $region36: #{tpu_custom_call.1} parent=11 // pred_fallthru
          _
        // Predicated region
        $region37: #{tpu_custom_call.1} parent=11 // pred_check
          %p405 = pneg %p269
        $region38: #{tpu_custom_call.1} parent=11 // pred_check_branch
          %407 = sbr.rel (%p405) target = $region40
        $region39: #{tpu_custom_call.1} parent=11 // pred_region
          %s409 = ssub.s32 512, 512
          %410 = vsyncadd [#allocation20], %s409
          %s411 = sshll.u32 [#allocation19], 4
          %s412 = int_to_ptr.vmem [resolvable:$true] %s411
          %417 = dma.hbm_to_vmem [thread:$0]  %s9, 512, %s412, [#allocation20], 128, 128, 8
        $region40: #{tpu_custom_call.1} parent=11 // pred_fallthru
          _
        // Predicated region
        $region41: #{tpu_custom_call.1} parent=11 // pred_check
          %p418 = pneg %p290
        $region42: #{tpu_custom_call.1} parent=11 // pred_check_branch
          %420 = sbr.rel (%p418) target = $region44
        $region43: #{tpu_custom_call.1} parent=11 // pred_region
          %s422 = ssub.s32 16, 16
          %423 = vsyncadd [#allocation20], %s422
          %s425 = sshll.u32 [#allocation21], 4
          %s426 = int_to_ptr.vmem [resolvable:$true] %s425
          %428 = dma.hbm_to_vmem [thread:$0]  %s10, 16, %s426, [#allocation20]
        $region44: #{tpu_custom_call.1} parent=11 // pred_fallthru
          _
      $region12: #{tpu_custom_call.1} parent=5 // pred_fallthru
        _
      %p429 = scmp.lt.s32.totalorder %s30, 4
      // Predicated region
      $region45: #{tpu_custom_call.1} parent=5 // pred_check
        %p430 = pneg %p429
      $region46: #{tpu_custom_call.1} parent=5 // pred_check_branch
        %432 = sbr.rel (%p430) target = $region48
      $region47: #{tpu_custom_call.1} parent=5 // pred_region
        // Predicated region
        $region49: #{tpu_custom_call.1} parent=47 // pred_check
          %p433 = pneg %p64
        $region50: #{tpu_custom_call.1} parent=47 // pred_check_branch
          %435 = sbr.rel (%p433) target = $region52
        $region51: #{tpu_custom_call.1} parent=47 // pred_region
          %s436 = sand.u32 %s54, 1
          %s437 = scalar_lea.sflag [#allocation5], %s436
          %s438 = sand.u32 %s54, 1
          %s439 = smul.addr %s438, 8
          %s440 = scalar_lea.vmem [#allocation4], %s439
          %s442 = ssub.s32 128, 128
          %443 = vsyncadd %s437, %s442
          %s444 = smul.addr %s37, 2
          %s445 = sadd.s32 %s38, %s444
          %s446 = smul.addr %s445, 128
          %s447 = scalar_lea.hbm %s0, %s446
          %s449 = sshll.u32 %s440, 4
          %s450 = int_to_ptr.vmem [resolvable:$true] %s449
          %452 = dma.hbm_to_vmem [thread:$0]  %s447, 128, %s450, %s437
        $region52: #{tpu_custom_call.1} parent=47 // pred_fallthru
          _
        // Predicated region
        $region53: #{tpu_custom_call.1} parent=47 // pred_check
          %p453 = pneg %p90
        $region54: #{tpu_custom_call.1} parent=47 // pred_check_branch
          %455 = sbr.rel (%p453) target = $region56
        $region55: #{tpu_custom_call.1} parent=47 // pred_region
          %s456 = sand.u32 %s30, 1
          %s457 = scalar_lea.sflag [#allocation8], %s456
          %s458 = sand.u32 %s80, 1
          %s459 = smul.addr %s458, 16
          %s460 = scalar_lea.vmem [#allocation7], %s459
          %s462 = ssub.s32 256, 256
          %463 = vsyncadd %s457, %s462
          %s464 = smul.addr %s37, 2
          %s465 = smul.addr %s464, 128
          %s466 = scalar_lea.hbm %s1, %s465
          %s467 = sshll.u32 %s460, 4
          %s468 = int_to_ptr.vmem [resolvable:$true] %s467
          %473 = dma.hbm_to_vmem [thread:$0]  %s466, 256, %s468, %s457, 128, 128, 8
        $region56: #{tpu_custom_call.1} parent=47 // pred_fallthru
          _
        // Predicated region
        $region57: #{tpu_custom_call.1} parent=47 // pred_check
          %p474 = pneg %p116
        $region58: #{tpu_custom_call.1} parent=47 // pred_check_branch
          %476 = sbr.rel (%p474) target = $region60
        $region59: #{tpu_custom_call.1} parent=47 // pred_region
          %s477 = sand.u32 %s30, 1
          %s478 = scalar_lea.sflag [#allocation8], %s477
          %s479 = sand.u32 %s106, 1
          %s480 = smul.addr %s479, 16
          %s481 = scalar_lea.vmem [#allocation9], %s480
          %s483 = ssub.s32 256, 256
          %484 = vsyncadd %s478, %s483
          %s485 = smul.addr %s37, 2
          %s486 = smul.addr %s485, 128
          %s487 = scalar_lea.hbm %s2, %s486
          %s488 = sshll.u32 %s481, 4
          %s489 = int_to_ptr.vmem [resolvable:$true] %s488
          %494 = dma.hbm_to_vmem [thread:$0]  %s487, 256, %s489, %s478, 128, 128, 8
        $region60: #{tpu_custom_call.1} parent=47 // pred_fallthru
          _
      $region48: #{tpu_custom_call.1} parent=5 // pred_fallthru
        _
      %p495 = scmp.le.s32.totalorder 1, %s30
      %p496 = scmp.lt.s32.totalorder %s30, 5
      %p497 = pnand %p495, %p496
      %p498 = pneg %p497
      // Predicated region
      $region61: #{tpu_custom_call.1} parent=5 // pred_check
        _
      $region62: #{tpu_custom_call.1} parent=5 // pred_check_branch
        %500 = sbr.rel (%p497) target = $region64
      $region63: #{tpu_custom_call.1} parent=5 // pred_region
        %s501 = ssub.s32 %s30, 1
        %s502 = sand.u32 %s57, 1
        %s503 = scalar_lea.sflag [#allocation5], %s502
        %s504 = sand.u32 %s57, 1
        %s505 = smul.addr %s504, 8
        %s506 = scalar_lea.vmem [#allocation4], %s505
        // Predicated region
        $region65: #{tpu_custom_call.1} parent=63 // pred_check
          %p507 = pneg %p70
        $region66: #{tpu_custom_call.1} parent=63 // pred_check_branch
          %509 = sbr.rel (%p507) target = $region68
        $region67: #{tpu_custom_call.1} parent=63 // pred_region
          %510 = dma.done %s503, 128
        $region68: #{tpu_custom_call.1} parent=63 // pred_fallthru
          _
        %s511 = sand.u32 %s35, 1
        %s512 = scalar_lea.sflag [#allocation8], %s511
        %s513 = sand.u32 %s83, 1
        %s514 = smul.addr %s513, 16
        %s515 = scalar_lea.vmem [#allocation7], %s514
        // Predicated region
        $region69: #{tpu_custom_call.1} parent=63 // pred_check
          %p516 = pneg %p96
        $region70: #{tpu_custom_call.1} parent=63 // pred_check_branch
          %518 = sbr.rel (%p516) target = $region72
        $region71: #{tpu_custom_call.1} parent=63 // pred_region
          %519 = dma.done %s512, 256
        $region72: #{tpu_custom_call.1} parent=63 // pred_fallthru
          _
        %s520 = sand.u32 %s35, 1
        %s521 = scalar_lea.sflag [#allocation8], %s520
        %s522 = sand.u32 %s109, 1
        %s523 = smul.addr %s522, 16
        %s524 = scalar_lea.vmem [#allocation9], %s523
        // Predicated region
        $region73: #{tpu_custom_call.1} parent=63 // pred_check
          %p525 = pneg %p122
        $region74: #{tpu_custom_call.1} parent=63 // pred_check_branch
          %527 = sbr.rel (%p525) target = $region76
        $region75: #{tpu_custom_call.1} parent=63 // pred_region
          %528 = dma.done %s521, 256
        $region76: #{tpu_custom_call.1} parent=63 // pred_fallthru
          _
        // Predicated region
        $region77: #{tpu_custom_call.1} parent=63 // pred_check
          %p529 = pneg %p143
        $region78: #{tpu_custom_call.1} parent=63 // pred_check_branch
          %531 = sbr.rel (%p529) target = $region80
        $region79: #{tpu_custom_call.1} parent=63 // pred_region
          %532 = dma.done [#allocation11], 512
        $region80: #{tpu_custom_call.1} parent=63 // pred_fallthru
          _
        // Predicated region
        $region81: #{tpu_custom_call.1} parent=63 // pred_check
          %p533 = pneg %p164
        $region82: #{tpu_custom_call.1} parent=63 // pred_check_branch
          %535 = sbr.rel (%p533) target = $region84
        $region83: #{tpu_custom_call.1} parent=63 // pred_region
          %536 = dma.done [#allocation11], 16
        $region84: #{tpu_custom_call.1} parent=63 // pred_fallthru
          _
        // Predicated region
        $region85: #{tpu_custom_call.1} parent=63 // pred_check
          %p537 = pneg %p185
        $region86: #{tpu_custom_call.1} parent=63 // pred_check_branch
          %539 = sbr.rel (%p537) target = $region88
        $region87: #{tpu_custom_call.1} parent=63 // pred_region
          %540 = dma.done [#allocation14], 512
        $region88: #{tpu_custom_call.1} parent=63 // pred_fallthru
          _
        // Predicated region
        $region89: #{tpu_custom_call.1} parent=63 // pred_check
          %p541 = pneg %p206
        $region90: #{tpu_custom_call.1} parent=63 // pred_check_branch
          %543 = sbr.rel (%p541) target = $region92
        $region91: #{tpu_custom_call.1} parent=63 // pred_region
          %544 = dma.done [#allocation14], 16
        $region92: #{tpu_custom_call.1} parent=63 // pred_fallthru
          _
        // Predicated region
        $region93: #{tpu_custom_call.1} parent=63 // pred_check
          %p545 = pneg %p227
        $region94: #{tpu_custom_call.1} parent=63 // pred_check_branch
          %547 = sbr.rel (%p545) target = $region96
        $region95: #{tpu_custom_call.1} parent=63 // pred_region
          %548 = dma.done [#allocation17], 512
        $region96: #{tpu_custom_call.1} parent=63 // pred_fallthru
          _
        // Predicated region
        $region97: #{tpu_custom_call.1} parent=63 // pred_check
          %p549 = pneg %p248
        $region98: #{tpu_custom_call.1} parent=63 // pred_check_branch
          %551 = sbr.rel (%p549) target = $region100
        $region99: #{tpu_custom_call.1} parent=63 // pred_region
          %552 = dma.done [#allocation17], 16
        $region100: #{tpu_custom_call.1} parent=63 // pred_fallthru
          _
        // Predicated region
        $region101: #{tpu_custom_call.1} parent=63 // pred_check
          %p553 = pneg %p269
        $region102: #{tpu_custom_call.1} parent=63 // pred_check_branch
          %555 = sbr.rel (%p553) target = $region104
        $region103: #{tpu_custom_call.1} parent=63 // pred_region
          %556 = dma.done [#allocation20], 512
        $region104: #{tpu_custom_call.1} parent=63 // pred_fallthru
          _
        // Predicated region
        $region105: #{tpu_custom_call.1} parent=63 // pred_check
          %p557 = pneg %p290
        $region106: #{tpu_custom_call.1} parent=63 // pred_check_branch
          %559 = sbr.rel (%p557) target = $region108
        $region107: #{tpu_custom_call.1} parent=63 // pred_region
          %560 = dma.done [#allocation20], 16
        $region108: #{tpu_custom_call.1} parent=63 // pred_fallthru
          _
        %s561 = sand.u32 %s57, 1
        %s562 = scalar_lea.sflag [#allocation5], %s561
        %s563 = sand.u32 %s57, 1
        %s564 = smul.addr %s563, 8
        %s565 = scalar_lea.vmem [#allocation4], %s564
        %p566 = pneg %p70
        %p567 = pneg %p67
        %s568 = sand.u32 %s35, 1
        %s569 = scalar_lea.sflag [#allocation8], %s568
        %s570 = sand.u32 %s83, 1
        %s571 = smul.addr %s570, 16
        %s572 = scalar_lea.vmem [#allocation7], %s571
        %p573 = pneg %p96
        %p574 = pneg %p93
        %s575 = sand.u32 %s35, 1
        %s576 = scalar_lea.sflag [#allocation8], %s575
        %s577 = sand.u32 %s109, 1
        %s578 = smul.addr %s577, 16
        %s579 = scalar_lea.vmem [#allocation9], %s578
        %p580 = pneg %p122
        %p581 = pneg %p119
        %p582 = pneg %p143
        %p583 = pneg %p140
        %p584 = pneg %p164
        %p585 = pneg %p161
        %p586 = pneg %p185
        %p587 = pneg %p182
        %p588 = pneg %p206
        %p589 = pneg %p203
        %p590 = pneg %p227
        %p591 = pneg %p224
        %p592 = pneg %p248
        %p593 = pneg %p245
        %p594 = pneg %p269
        %p595 = pneg %p266
        %p596 = pneg %p290
        %p597 = pneg %p287
        %p598 = pneg %p318
        %p599 = pneg %p315
        %s600 = sand.u32 %s305, 1
        %s601 = scalar_lea.sflag [#allocation6], %s600
        %s602 = sand.u32 %s305, 1
        %s603 = smul.addr %s602, 8
        %s604 = scalar_lea.vmem [#allocation22], %s603
        %p605 = scmp.eq.s32.totalorder %s40, 0
        // Predicated region
        $region109: #{tpu_custom_call.1} parent=63 // pred_check
          %p606 = pneg %p605
        $region110: #{tpu_custom_call.1} parent=63 // pred_check_branch
          %608 = sbr.rel (%p606) target = $region112
        $region111: #{tpu_custom_call.1} parent=63 // pred_region
          %v609 = vld [vmem:[%s515] sm:$0xff]
          %v610 = vld [vmem:[%s515 + $0x8] sm:$0xff]
          %v611 = vld [vmem:[#allocation13] sm:$0xff]
          %v612 = vld [vmem:[#allocation13 + $0x8] sm:$0xff]
          %v613 = vld [vmem:[#allocation13 + $0x10] sm:$0xff]
          %v614 = vld [vmem:[#allocation13 + $0x18] sm:$0xff]
          %v615 = vld [vmem:[#allocation15] sm:$0x1]
          %v617 = vlaneseq
          %v618 = vshrl.u32 %v617, 7
          %v619 = vsub.s32 0, %v618
          %v620 = vrot.slane %v615, %v619
          %vm622 = vcmask 261120
          %v624 = vsel %vm622, %v609, 0
          %v627 = vsel %vm622, %v610, 0
          %629 = vmatprep.subr.mxu0 0.0
          %630 = vmatpush1.msra.mxu0 %v611
          %631 = vmatprep.subr.mxu0 0.0
          %632 = vmatpush1.msra.mxu0 %v612
          %633 = vmatprep.subr.mxu0 0.0
          %634 = vmatpush1.msra.mxu0 %v613
          %635 = vmatprep.subr.mxu0 0.0
          %636 = vmatpush1.msra.mxu0 %v614
          %637 = vmatprep.subr.mxu0 0.0
          %638 = vmatpush1.msra.mxu0 0.0
          %639 = vmatprep.subr.mxu0 0.0
          %640 = vmatpush1.msra.mxu0 0.0
          %641 = vmatprep.subr.mxu0 0.0
          %642 = vmatpush1.msra.mxu0 0.0
          %643 = vmatprep.subr.mxu0 0.0
          %644 = vmatpush1.msra.mxu0 0.0
          %645 = vmatprep.subr.mxu0 0.0
          %646 = vmatpush1.msra.mxu0 0.0
          %647 = vmatprep.subr.mxu0 0.0
          %648 = vmatpush1.msra.mxu0 0.0
          %649 = vmatprep.subr.mxu0 0.0
          %650 = vmatpush1.msra.mxu0 0.0
          %651 = vmatprep.subr.mxu0 0.0
          %652 = vmatpush1.msra.mxu0 0.0
          %653 = vmatprep.subr.mxu0 0.0
          %654 = vmatpush1.msra.mxu0 0.0
          %655 = vmatprep.subr.mxu0 0.0
          %656 = vmatpush1.msra.mxu0 0.0
          %657 = vmatprep.subr.mxu0 0.0
          %658 = vmatpush1.msra.mxu0 0.0
          %659 = vmatprep.subr.mxu0 0.0
          %660 = vmatpush1.msra.mxu0 0.0
          %661 = vmatprep.subr.mxu0 0.0
          %662 = vmatpush1.msra.mxu0 0.0
          %663 = vmatprep.subr.mxu0 0.0
          %664 = vmatpush1.msra.mxu0 0.0
          %665 = vmatprep.subr.mxu0 0.0
          %666 = vmatpush1.msra.mxu0 0.0
          %667 = vmatprep.subr.mxu0 0.0
          %668 = vmatpush1.msra.mxu0 0.0
          %669 = vmatprep.subr.mxu0 0.0
          %670 = vmatpush1.msra.mxu0 0.0
          %671 = vmatprep.subr.mxu0 0.0
          %672 = vmatpush1.msra.mxu0 0.0
          %673 = vmatprep.subr.mxu0 0.0
          %674 = vmatpush1.msra.mxu0 0.0
          %675 = vmatprep.subr.mxu0 0.0
          %676 = vmatpush1.msra.mxu0 0.0
          %677 = vmatprep.subr.mxu0 0.0
          %678 = vmatpush1.msra.mxu0 0.0
          %679 = vmatprep.subr.mxu0 0.0
          %680 = vmatpush1.msra.mxu0 0.0
          %681 = vmatprep.subr.mxu0 0.0
          %682 = vmatpush1.msra.mxu0 0.0
          %683 = vmatprep.subr.mxu0 0.0
          %684 = vmatpush1.msra.mxu0 0.0
          %685 = vmatprep.subr.mxu0 0.0
          %686 = vmatpush1.msra.mxu0 0.0
          %687 = vmatprep.subr.mxu0 0.0
          %688 = vmatpush1.msra.mxu0 0.0
          %689 = vmatprep.subr.mxu0 0.0
          %690 = vmatpush1.msra.mxu0 0.0
          %691 = vmatprep.subr.mxu0 0.0
          %692 = vmatpush1.msra.mxu0 0.0
          %693 = vmatprep.mubr.f32.mxu0 0.0
          %694 = vmatmul.mubr.f32.gmra.mrb[0].mxu0 %v624
          %v695 = vpop.f32.mrb[0].mxu0
          %v696 = vadd.f32 %v620, %v695
          %v697 = vpop.f32.mrb[0].mxu0
          %698 = vmatprep.mubr.f32.mxu0 0.0
          %699 = vmatmul.mubr.f32.gmra.mrb[0].mxu0 %v627
          %v700 = vpop.f32.mrb[0].mxu0
          %v701 = vadd.f32 %v620, %v700
          %v702 = vpop.f32.mrb[0].mxu0
          %703 = vdwg.mxu0
          %v704 = vld [vmem:[%s524] sm:$0xff]
          %v705 = vld [vmem:[%s524 + $0x8] sm:$0xff]
          %v706 = vld [vmem:[#allocation16] sm:$0xff]
          %v707 = vld [vmem:[#allocation16 + $0x8] sm:$0xff]
          %v708 = vld [vmem:[#allocation16 + $0x10] sm:$0xff]
          %v709 = vld [vmem:[#allocation16 + $0x18] sm:$0xff]
          %v710 = vld [vmem:[#allocation18] sm:$0x1]
          %v712 = vlaneseq
          %v713 = vshrl.u32 %v712, 7
          %v714 = vsub.s32 0, %v713
          %v715 = vrot.slane %v710, %v714
          %v718 = vsel %vm622, %v704, 0
          %v721 = vsel %vm622, %v705, 0
          %723 = vmatprep.subr.mxu0 0.0
          %724 = vmatpush1.msra.mxu0 %v706
          %725 = vmatprep.subr.mxu0 0.0
          %726 = vmatpush1.msra.mxu0 %v707
          %727 = vmatprep.subr.mxu0 0.0
          %728 = vmatpush1.msra.mxu0 %v708
          %729 = vmatprep.subr.mxu0 0.0
          %730 = vmatpush1.msra.mxu0 %v709
          %731 = vmatprep.subr.mxu0 0.0
          %732 = vmatpush1.msra.mxu0 0.0
          %733 = vmatprep.subr.mxu0 0.0
          %734 = vmatpush1.msra.mxu0 0.0
          %735 = vmatprep.subr.mxu0 0.0
          %736 = vmatpush1.msra.mxu0 0.0
          %737 = vmatprep.subr.mxu0 0.0
          %738 = vmatpush1.msra.mxu0 0.0
          %739 = vmatprep.subr.mxu0 0.0
          %740 = vmatpush1.msra.mxu0 0.0
          %741 = vmatprep.subr.mxu0 0.0
          %742 = vmatpush1.msra.mxu0 0.0
          %743 = vmatprep.subr.mxu0 0.0
          %744 = vmatpush1.msra.mxu0 0.0
          %745 = vmatprep.subr.mxu0 0.0
          %746 = vmatpush1.msra.mxu0 0.0
          %747 = vmatprep.subr.mxu0 0.0
          %748 = vmatpush1.msra.mxu0 0.0
          %749 = vmatprep.subr.mxu0 0.0
          %750 = vmatpush1.msra.mxu0 0.0
          %751 = vmatprep.subr.mxu0 0.0
          %752 = vmatpush1.msra.mxu0 0.0
          %753 = vmatprep.subr.mxu0 0.0
          %754 = vmatpush1.msra.mxu0 0.0
          %755 = vmatprep.subr.mxu0 0.0
          %756 = vmatpush1.msra.mxu0 0.0
          %757 = vmatprep.subr.mxu0 0.0
          %758 = vmatpush1.msra.mxu0 0.0
          %759 = vmatprep.subr.mxu0 0.0
          %760 = vmatpush1.msra.mxu0 0.0
          %761 = vmatprep.subr.mxu0 0.0
          %762 = vmatpush1.msra.mxu0 0.0
          %763 = vmatprep.subr.mxu0 0.0
          %764 = vmatpush1.msra.mxu0 0.0
          %765 = vmatprep.subr.mxu0 0.0
          %766 = vmatpush1.msra.mxu0 0.0
          %767 = vmatprep.subr.mxu0 0.0
          %768 = vmatpush1.msra.mxu0 0.0
          %769 = vmatprep.subr.mxu0 0.0
          %770 = vmatpush1.msra.mxu0 0.0
          %771 = vmatprep.subr.mxu0 0.0
          %772 = vmatpush1.msra.mxu0 0.0
          %773 = vmatprep.subr.mxu0 0.0
          %774 = vmatpush1.msra.mxu0 0.0
          %775 = vmatprep.subr.mxu0 0.0
          %776 = vmatpush1.msra.mxu0 0.0
          %777 = vmatprep.subr.mxu0 0.0
          %778 = vmatpush1.msra.mxu0 0.0
          %779 = vmatprep.subr.mxu0 0.0
          %780 = vmatpush1.msra.mxu0 0.0
          %781 = vmatprep.subr.mxu0 0.0
          %782 = vmatpush1.msra.mxu0 0.0
          %783 = vmatprep.subr.mxu0 0.0
          %784 = vmatpush1.msra.mxu0 0.0
          %785 = vmatprep.subr.mxu0 0.0
          %786 = vmatpush1.msra.mxu0 0.0
          %787 = vmatprep.mubr.f32.mxu0 0.0
          %788 = vmatmul.mubr.f32.gmra.mrb[0].mxu0 %v718
          %v789 = vpop.f32.mrb[0].mxu0
          %v790 = vadd.f32 %v715, %v789
          %v791 = vpop.f32.mrb[0].mxu0
          %792 = vmatprep.mubr.f32.mxu0 0.0
          %793 = vmatmul.mubr.f32.gmra.mrb[0].mxu0 %v721
          %v794 = vpop.f32.mrb[0].mxu0
          %v795 = vadd.f32 %v715, %v794
          %v796 = vpop.f32.mrb[0].mxu0
          %797 = vdwg.mxu0
          %798 = vst.msk [vmem:[#allocation2] sm:$0xff] %vm622, %v696
          %799 = vst.msk [vmem:[#allocation2 + $0x8] sm:$0xff] %vm622, %v701
          %800 = vst.msk [vmem:[#allocation3] sm:$0xff] %vm622, %v790
          %801 = vst.msk [vmem:[#allocation3 + $0x8] sm:$0xff] %vm622, %v795
        $region112: #{tpu_custom_call.1} parent=63 // pred_fallthru
          _
        %v802 = vld [vmem:[%s506] sm:$0xff]
        %v803 = vld [vmem:[#allocation10] sm:$0xff]
        %v804 = vld [vmem:[#allocation10 + $0x8] sm:$0xff]
        %v805 = vld [vmem:[#allocation10 + $0x10] sm:$0xff]
        %v806 = vld [vmem:[#allocation10 + $0x18] sm:$0xff]
        %v807 = vld [vmem:[#allocation12] sm:$0x1]
        %v809 = vlaneseq
        %v810 = vshrl.u32 %v809, 7
        %v811 = vsub.s32 0, %v810
        %v812 = vrot.slane %v807, %v811
        %vm814 = vcmask 261120
        %v816 = vsel %vm814, %v802, 0
        %818 = vmatprep.subr.mxu0 0.0
        %819 = vmatpush1.msra.mxu0 %v803
        %820 = vmatprep.subr.mxu0 0.0
        %821 = vmatpush1.msra.mxu0 %v804
        %822 = vmatprep.subr.mxu0 0.0
        %823 = vmatpush1.msra.mxu0 %v805
        %824 = vmatprep.subr.mxu0 0.0
        %825 = vmatpush1.msra.mxu0 %v806
        %826 = vmatprep.subr.mxu0 0.0
        %827 = vmatpush1.msra.mxu0 0.0
        %828 = vmatprep.subr.mxu0 0.0
        %829 = vmatpush1.msra.mxu0 0.0
        %830 = vmatprep.subr.mxu0 0.0
        %831 = vmatpush1.msra.mxu0 0.0
        %832 = vmatprep.subr.mxu0 0.0
        %833 = vmatpush1.msra.mxu0 0.0
        %834 = vmatprep.subr.mxu0 0.0
        %835 = vmatpush1.msra.mxu0 0.0
        %836 = vmatprep.subr.mxu0 0.0
        %837 = vmatpush1.msra.mxu0 0.0
        %838 = vmatprep.subr.mxu0 0.0
        %839 = vmatpush1.msra.mxu0 0.0
        %840 = vmatprep.subr.mxu0 0.0
        %841 = vmatpush1.msra.mxu0 0.0
        %842 = vmatprep.subr.mxu0 0.0
        %843 = vmatpush1.msra.mxu0 0.0
        %844 = vmatprep.subr.mxu0 0.0
        %845 = vmatpush1.msra.mxu0 0.0
        %846 = vmatprep.subr.mxu0 0.0
        %847 = vmatpush1.msra.mxu0 0.0
        %848 = vmatprep.subr.mxu0 0.0
        %849 = vmatpush1.msra.mxu0 0.0
        %850 = vmatprep.subr.mxu0 0.0
        %851 = vmatpush1.msra.mxu0 0.0
        %852 = vmatprep.subr.mxu0 0.0
        %853 = vmatpush1.msra.mxu0 0.0
        %854 = vmatprep.subr.mxu0 0.0
        %855 = vmatpush1.msra.mxu0 0.0
        %856 = vmatprep.subr.mxu0 0.0
        %857 = vmatpush1.msra.mxu0 0.0
        %858 = vmatprep.subr.mxu0 0.0
        %859 = vmatpush1.msra.mxu0 0.0
        %860 = vmatprep.subr.mxu0 0.0
        %861 = vmatpush1.msra.mxu0 0.0
        %862 = vmatprep.subr.mxu0 0.0
        %863 = vmatpush1.msra.mxu0 0.0
        %864 = vmatprep.subr.mxu0 0.0
        %865 = vmatpush1.msra.mxu0 0.0
        %866 = vmatprep.subr.mxu0 0.0
        %867 = vmatpush1.msra.mxu0 0.0
        %868 = vmatprep.subr.mxu0 0.0
        %869 = vmatpush1.msra.mxu0 0.0
        %870 = vmatprep.subr.mxu0 0.0
        %871 = vmatpush1.msra.mxu0 0.0
        %872 = vmatprep.subr.mxu0 0.0
        %873 = vmatpush1.msra.mxu0 0.0
        %874 = vmatprep.subr.mxu0 0.0
        %875 = vmatpush1.msra.mxu0 0.0
        %876 = vmatprep.subr.mxu0 0.0
        %877 = vmatpush1.msra.mxu0 0.0
        %878 = vmatprep.subr.mxu0 0.0
        %879 = vmatpush1.msra.mxu0 0.0
        %880 = vmatprep.subr.mxu0 0.0
        %881 = vmatpush1.msra.mxu0 0.0
        %882 = vmatprep.mubr.f32.mxu0 0.0
        %883 = vmatmul.mubr.f32.gmra.mrb[0].mxu0 %v816
        %v884 = vpop.f32.mrb[0].mxu0
        %v885 = vadd.f32 %v812, %v884
        %v886 = vpop.f32.mrb[0].mxu0
        %887 = vdwg.mxu0
        %v888 = vmul.f32 %v885, 0.35355338
        %v889 = vld [vmem:[#allocation2] sm:$0xff]
        %v890 = vld [vmem:[#allocation2 + $0x8] sm:$0xff]
        %v891 = vld [vmem:[#allocation3] sm:$0xff]
        %v892 = vld [vmem:[#allocation3 + $0x8] sm:$0xff]
        %vm893 = vcmask 64512
        %v895 = vsel %vm893, %v888, 0
        %v898 = vsel %vm893, %v889, 0
        %v901 = vsel %vm893, %v890, 0
        %903 = vmatprep.subr.mxu0 0.0
        %904 = vmatpush1.xpose.msra.mxu0 %v898
        %905 = vmatprep.subr.mxu0 0.0
        %906 = vmatpush1.xpose.msra.mxu0 %v901
        %907 = vmatprep.subr.mxu0 0.0
        %908 = vmatpush1.xpose.msra.mxu0 0.0
        %909 = vmatprep.subr.mxu0 0.0
        %910 = vmatpush1.xpose.msra.mxu0 0.0
        %911 = vmatprep.subr.mxu0 0.0
        %912 = vmatpush1.xpose.msra.mxu0 0.0
        %913 = vmatprep.subr.mxu0 0.0
        %914 = vmatpush1.xpose.msra.mxu0 0.0
        %915 = vmatprep.subr.mxu0 0.0
        %916 = vmatpush1.xpose.msra.mxu0 0.0
        %917 = vmatprep.subr.mxu0 0.0
        %918 = vmatpush1.xpose.msra.mxu0 0.0
        %919 = vmatprep.subr.mxu0 0.0
        %920 = vmatpush1.xpose.msra.mxu0 0.0
        %921 = vmatprep.subr.mxu0 0.0
        %922 = vmatpush1.xpose.msra.mxu0 0.0
        %923 = vmatprep.subr.mxu0 0.0
        %924 = vmatpush1.xpose.msra.mxu0 0.0
        %925 = vmatprep.subr.mxu0 0.0
        %926 = vmatpush1.xpose.msra.mxu0 0.0
        %927 = vmatprep.subr.mxu0 0.0
        %928 = vmatpush1.xpose.msra.mxu0 0.0
        %929 = vmatprep.subr.mxu0 0.0
        %930 = vmatpush1.xpose.msra.mxu0 0.0
        %931 = vmatprep.subr.mxu0 0.0
        %932 = vmatpush1.xpose.msra.mxu0 0.0
        %933 = vmatprep.subr.mxu0 0.0
        %934 = vmatpush1.xpose.msra.mxu0 0.0
        %935 = vmatprep.subr.mxu0 0.0
        %936 = vmatpush1.xpose.msra.mxu0 0.0
        %937 = vmatprep.subr.mxu0 0.0
        %938 = vmatpush1.xpose.msra.mxu0 0.0
        %939 = vmatprep.subr.mxu0 0.0
        %940 = vmatpush1.xpose.msra.mxu0 0.0
        %941 = vmatprep.subr.mxu0 0.0
        %942 = vmatpush1.xpose.msra.mxu0 0.0
        %943 = vmatprep.subr.mxu0 0.0
        %944 = vmatpush1.xpose.msra.mxu0 0.0
        %945 = vmatprep.subr.mxu0 0.0
        %946 = vmatpush1.xpose.msra.mxu0 0.0
        %947 = vmatprep.subr.mxu0 0.0
        %948 = vmatpush1.xpose.msra.mxu0 0.0
        %949 = vmatprep.subr.mxu0 0.0
        %950 = vmatpush1.xpose.msra.mxu0 0.0
        %951 = vmatprep.subr.mxu0 0.0
        %952 = vmatpush1.xpose.msra.mxu0 0.0
        %953 = vmatprep.subr.mxu0 0.0
        %954 = vmatpush1.xpose.msra.mxu0 0.0
        %955 = vmatprep.subr.mxu0 0.0
        %956 = vmatpush1.xpose.msra.mxu0 0.0
        %957 = vmatprep.subr.mxu0 0.0
        %958 = vmatpush1.xpose.msra.mxu0 0.0
        %959 = vmatprep.subr.mxu0 0.0
        %960 = vmatpush1.xpose.msra.mxu0 0.0
        %961 = vmatprep.subr.mxu0 0.0
        %962 = vmatpush1.xpose.msra.mxu0 0.0
        %963 = vmatprep.subr.mxu0 0.0
        %964 = vmatpush1.xpose.msra.mxu0 0.0
        %965 = vmatprep.subr.mxu0 0.0
        %966 = vmatpush1.xpose.msra.mxu0 0.0
        %967 = vmatprep.mubr.f32.mxu0 0.0
        %968 = vmatmul.mubr.f32.gmra.mrb[0].mxu0 %v895
        %v969 = vpop.f32.mrb[0].mxu0
        %v970 = vadd.f32 0.0, %v969
        %v971 = vpop.f32.mrb[0].mxu0
        %972 = vdwg.mxu0
        %vm973 = vcmask 130048
        %v974 = vsel %vm973, %v970, -inf
        %975 = vmax.xlane.f32.xlu0 %v974
        %v976 = vpop.xlane.xlu0 %975
        %v977 = vsub.f32 %v970, %v976
        %v978 = vmul.f32 %v977, 1.442695
        %v979 = vpow.pop %v978
        %v980 = vsel %vm973, %v979, 0.0
        %981 = vadd.xlane.f32.xlu0 %v980
        %v982 = vpop.xlane.xlu0 %981
        %v983 = vrcp.pop %v982
        %v984 = vmul.f32 %v979, %v983
        %v986 = vsel %vm973, %v984, 0
        %988 = vmatprep.subr.mxu0 0.0
        %989 = vmatpush1.msra.mxu0 %v891
        %990 = vmatprep.subr.mxu0 0.0
        %991 = vmatpush1.msra.mxu0 %v892
        %992 = vmatprep.subr.mxu0 0.0
        %993 = vmatpush1.msra.mxu0 0.0
        %994 = vmatprep.subr.mxu0 0.0
        %995 = vmatpush1.msra.mxu0 0.0
        %996 = vmatprep.subr.mxu0 0.0
        %997 = vmatpush1.msra.mxu0 0.0
        %998 = vmatprep.subr.mxu0 0.0
        %999 = vmatpush1.msra.mxu0 0.0
        %1000 = vmatprep.subr.mxu0 0.0
        %1001 = vmatpush1.msra.mxu0 0.0
        %1002 = vmatprep.subr.mxu0 0.0
        %1003 = vmatpush1.msra.mxu0 0.0
        %1004 = vmatprep.subr.mxu0 0.0
        %1005 = vmatpush1.msra.mxu0 0.0
        %1006 = vmatprep.subr.mxu0 0.0
        %1007 = vmatpush1.msra.mxu0 0.0
        %1008 = vmatprep.subr.mxu0 0.0
        %1009 = vmatpush1.msra.mxu0 0.0
        %1010 = vmatprep.subr.mxu0 0.0
        %1011 = vmatpush1.msra.mxu0 0.0
        %1012 = vmatprep.subr.mxu0 0.0
        %1013 = vmatpush1.msra.mxu0 0.0
        %1014 = vmatprep.subr.mxu0 0.0
        %1015 = vmatpush1.msra.mxu0 0.0
        %1016 = vmatprep.subr.mxu0 0.0
        %1017 = vmatpush1.msra.mxu0 0.0
        %1018 = vmatprep.subr.mxu0 0.0
        %1019 = vmatpush1.msra.mxu0 0.0
        %1020 = vmatprep.subr.mxu0 0.0
        %1021 = vmatpush1.msra.mxu0 0.0
        %1022 = vmatprep.subr.mxu0 0.0
        %1023 = vmatpush1.msra.mxu0 0.0
        %1024 = vmatprep.subr.mxu0 0.0
        %1025 = vmatpush1.msra.mxu0 0.0
        %1026 = vmatprep.subr.mxu0 0.0
        %1027 = vmatpush1.msra.mxu0 0.0
        %1028 = vmatprep.subr.mxu0 0.0
        %1029 = vmatpush1.msra.mxu0 0.0
        %1030 = vmatprep.subr.mxu0 0.0
        %1031 = vmatpush1.msra.mxu0 0.0
        %1032 = vmatprep.subr.mxu0 0.0
        %1033 = vmatpush1.msra.mxu0 0.0
        %1034 = vmatprep.subr.mxu0 0.0
        %1035 = vmatpush1.msra.mxu0 0.0
        %1036 = vmatprep.subr.mxu0 0.0
        %1037 = vmatpush1.msra.mxu0 0.0
        %1038 = vmatprep.subr.mxu0 0.0
        %1039 = vmatpush1.msra.mxu0 0.0
        %1040 = vmatprep.subr.mxu0 0.0
        %1041 = vmatpush1.msra.mxu0 0.0
        %1042 = vmatprep.subr.mxu0 0.0
        %1043 = vmatpush1.msra.mxu0 0.0
        %1044 = vmatprep.subr.mxu0 0.0
        %1045 = vmatpush1.msra.mxu0 0.0
        %1046 = vmatprep.subr.mxu0 0.0
        %1047 = vmatpush1.msra.mxu0 0.0
        %1048 = vmatprep.subr.mxu0 0.0
        %1049 = vmatpush1.msra.mxu0 0.0
        %1050 = vmatprep.subr.mxu0 0.0
        %1051 = vmatpush1.msra.mxu0 0.0
        %1052 = vmatprep.mubr.f32.mxu0 0.0
        %1053 = vmatmul.mubr.f32.gmra.mrb[0].mxu0 %v986
        %v1054 = vpop.f32.mrb[0].mxu0
        %v1055 = vadd.f32 0.0, %v1054
        %v1056 = vpop.f32.mrb[0].mxu0
        %1057 = vdwg.mxu0
        %1058 = vrot.lane.b32.xlu0 %v888, 120
        %v1059 = vpop.permute.xlu0 %1058
        %1060 = vrot.lane.b32.xlu0 %v889, 120
        %v1061 = vpop.permute.xlu0 %1060
        %1062 = vrot.lane.b32.xlu0 %v890, 120
        %v1063 = vpop.permute.xlu0 %1062
        %v1064 = vsel %vm893, %v1059, 0
        %v1066 = vsel %vm893, %v1061, 0
        %v1068 = vsel %vm893, %v1063, 0
        %1070 = vmatprep.subr.mxu0 0.0
        %1071 = vmatpush1.xpose.msra.mxu0 %v1066
        %1072 = vmatprep.subr.mxu0 0.0
        %1073 = vmatpush1.xpose.msra.mxu0 %v1068
        %1074 = vmatprep.subr.mxu0 0.0
        %1075 = vmatpush1.xpose.msra.mxu0 0.0
        %1076 = vmatprep.subr.mxu0 0.0
        %1077 = vmatpush1.xpose.msra.mxu0 0.0
        %1078 = vmatprep.subr.mxu0 0.0
        %1079 = vmatpush1.xpose.msra.mxu0 0.0
        %1080 = vmatprep.subr.mxu0 0.0
        %1081 = vmatpush1.xpose.msra.mxu0 0.0
        %1082 = vmatprep.subr.mxu0 0.0
        %1083 = vmatpush1.xpose.msra.mxu0 0.0
        %1084 = vmatprep.subr.mxu0 0.0
        %1085 = vmatpush1.xpose.msra.mxu0 0.0
        %1086 = vmatprep.subr.mxu0 0.0
        %1087 = vmatpush1.xpose.msra.mxu0 0.0
        %1088 = vmatprep.subr.mxu0 0.0
        %1089 = vmatpush1.xpose.msra.mxu0 0.0
        %1090 = vmatprep.subr.mxu0 0.0
        %1091 = vmatpush1.xpose.msra.mxu0 0.0
        %1092 = vmatprep.subr.mxu0 0.0
        %1093 = vmatpush1.xpose.msra.mxu0 0.0
        %1094 = vmatprep.subr.mxu0 0.0
        %1095 = vmatpush1.xpose.msra.mxu0 0.0
        %1096 = vmatprep.subr.mxu0 0.0
        %1097 = vmatpush1.xpose.msra.mxu0 0.0
        %1098 = vmatprep.subr.mxu0 0.0
        %1099 = vmatpush1.xpose.msra.mxu0 0.0
        %1100 = vmatprep.subr.mxu0 0.0
        %1101 = vmatpush1.xpose.msra.mxu0 0.0
        %1102 = vmatprep.subr.mxu0 0.0
        %1103 = vmatpush1.xpose.msra.mxu0 0.0
        %1104 = vmatprep.subr.mxu0 0.0
        %1105 = vmatpush1.xpose.msra.mxu0 0.0
        %1106 = vmatprep.subr.mxu0 0.0
        %1107 = vmatpush1.xpose.msra.mxu0 0.0
        %1108 = vmatprep.subr.mxu0 0.0
        %1109 = vmatpush1.xpose.msra.mxu0 0.0
        %1110 = vmatprep.subr.mxu0 0.0
        %1111 = vmatpush1.xpose.msra.mxu0 0.0
        %1112 = vmatprep.subr.mxu0 0.0
        %1113 = vmatpush1.xpose.msra.mxu0 0.0
        %1114 = vmatprep.subr.mxu0 0.0
        %1115 = vmatpush1.xpose.msra.mxu0 0.0
        %1116 = vmatprep.subr.mxu0 0.0
        %1117 = vmatpush1.xpose.msra.mxu0 0.0
        %1118 = vmatprep.subr.mxu0 0.0
        %1119 = vmatpush1.xpose.msra.mxu0 0.0
        %1120 = vmatprep.subr.mxu0 0.0
        %1121 = vmatpush1.xpose.msra.mxu0 0.0
        %1122 = vmatprep.subr.mxu0 0.0
        %1123 = vmatpush1.xpose.msra.mxu0 0.0
        %1124 = vmatprep.subr.mxu0 0.0
        %1125 = vmatpush1.xpose.msra.mxu0 0.0
        %1126 = vmatprep.subr.mxu0 0.0
        %1127 = vmatpush1.xpose.msra.mxu0 0.0
        %1128 = vmatprep.subr.mxu0 0.0
        %1129 = vmatpush1.xpose.msra.mxu0 0.0
        %1130 = vmatprep.subr.mxu0 0.0
        %1131 = vmatpush1.xpose.msra.mxu0 0.0
        %1132 = vmatprep.subr.mxu0 0.0
        %1133 = vmatpush1.xpose.msra.mxu0 0.0
        %1134 = vmatprep.mubr.f32.mxu0 0.0
        %1135 = vmatmul.mubr.f32.gmra.mrb[0].mxu0 %v1064
        %v1136 = vpop.f32.mrb[0].mxu0
        %v1137 = vadd.f32 0.0, %v1136
        %v1138 = vpop.f32.mrb[0].mxu0
        %1139 = vdwg.mxu0
        %v1140 = vsel %vm973, %v1137, -inf
        %1141 = vmax.xlane.f32.xlu0 %v1140
        %v1142 = vpop.xlane.xlu0 %1141
        %v1143 = vsub.f32 %v1137, %v1142
        %v1144 = vmul.f32 %v1143, 1.442695
        %v1145 = vpow.pop %v1144
        %v1146 = vsel %vm973, %v1145, 0.0
        %1147 = vadd.xlane.f32.xlu0 %v1146
        %v1148 = vpop.xlane.xlu0 %1147
        %v1149 = vrcp.pop %v1148
        %v1150 = vmul.f32 %v1145, %v1149
        %1153 = vrot.lane.b32.xlu0 %v891, 120
        %v1154 = vpop.permute.xlu0 %1153
        %1155 = vrot.lane.b32.xlu0 %v892, 120
        %v1156 = vpop.permute.xlu0 %1155
        %v1160 = vsel %vm973, %v1150, 0
        %1162 = vmatprep.subr.mxu0 0.0
        %1163 = vmatpush1.msra.mxu0 %v1154
        %1164 = vmatprep.subr.mxu0 0.0
        %1165 = vmatpush1.msra.mxu0 %v1156
        %1166 = vmatprep.subr.mxu0 0.0
        %1167 = vmatpush1.msra.mxu0 0.0
        %1168 = vmatprep.subr.mxu0 0.0
        %1169 = vmatpush1.msra.mxu0 0.0
        %1170 = vmatprep.subr.mxu0 0.0
        %1171 = vmatpush1.msra.mxu0 0.0
        %1172 = vmatprep.subr.mxu0 0.0
        %1173 = vmatpush1.msra.mxu0 0.0
        %1174 = vmatprep.subr.mxu0 0.0
        %1175 = vmatpush1.msra.mxu0 0.0
        %1176 = vmatprep.subr.mxu0 0.0
        %1177 = vmatpush1.msra.mxu0 0.0
        %1178 = vmatprep.subr.mxu0 0.0
        %1179 = vmatpush1.msra.mxu0 0.0
        %1180 = vmatprep.subr.mxu0 0.0
        %1181 = vmatpush1.msra.mxu0 0.0
        %1182 = vmatprep.subr.mxu0 0.0
        %1183 = vmatpush1.msra.mxu0 0.0
        %1184 = vmatprep.subr.mxu0 0.0
        %1185 = vmatpush1.msra.mxu0 0.0
        %1186 = vmatprep.subr.mxu0 0.0
        %1187 = vmatpush1.msra.mxu0 0.0
        %1188 = vmatprep.subr.mxu0 0.0
        %1189 = vmatpush1.msra.mxu0 0.0
        %1190 = vmatprep.subr.mxu0 0.0
        %1191 = vmatpush1.msra.mxu0 0.0
        %1192 = vmatprep.subr.mxu0 0.0
        %1193 = vmatpush1.msra.mxu0 0.0
        %1194 = vmatprep.subr.mxu0 0.0
        %1195 = vmatpush1.msra.mxu0 0.0
        %1196 = vmatprep.subr.mxu0 0.0
        %1197 = vmatpush1.msra.mxu0 0.0
        %1198 = vmatprep.subr.mxu0 0.0
        %1199 = vmatpush1.msra.mxu0 0.0
        %1200 = vmatprep.subr.mxu0 0.0
        %1201 = vmatpush1.msra.mxu0 0.0
        %1202 = vmatprep.subr.mxu0 0.0
        %1203 = vmatpush1.msra.mxu0 0.0
        %1204 = vmatprep.subr.mxu0 0.0
        %1205 = vmatpush1.msra.mxu0 0.0
        %1206 = vmatprep.subr.mxu0 0.0
        %1207 = vmatpush1.msra.mxu0 0.0
        %1208 = vmatprep.subr.mxu0 0.0
        %1209 = vmatpush1.msra.mxu0 0.0
        %1210 = vmatprep.subr.mxu0 0.0
        %1211 = vmatpush1.msra.mxu0 0.0
        %1212 = vmatprep.subr.mxu0 0.0
        %1213 = vmatpush1.msra.mxu0 0.0
        %1214 = vmatprep.subr.mxu0 0.0
        %1215 = vmatpush1.msra.mxu0 0.0
        %1216 = vmatprep.subr.mxu0 0.0
        %1217 = vmatpush1.msra.mxu0 0.0
        %1218 = vmatprep.subr.mxu0 0.0
        %1219 = vmatpush1.msra.mxu0 0.0
        %1220 = vmatprep.subr.mxu0 0.0
        %1221 = vmatpush1.msra.mxu0 0.0
        %1222 = vmatprep.subr.mxu0 0.0
        %1223 = vmatpush1.msra.mxu0 0.0
        %1224 = vmatprep.subr.mxu0 0.0
        %1225 = vmatpush1.msra.mxu0 0.0
        %1226 = vmatprep.mubr.f32.mxu0 0.0
        %1227 = vmatmul.mubr.f32.gmra.mrb[0].mxu0 %v1160
        %v1228 = vpop.f32.mrb[0].mxu0
        %v1229 = vadd.f32 0.0, %v1228
        %v1230 = vpop.f32.mrb[0].mxu0
        %1231 = vdwg.mxu0
        %1232 = vrot.lane.b32.xlu0 %v888, 112
        %v1233 = vpop.permute.xlu0 %1232
        %1234 = vrot.lane.b32.xlu0 %v889, 112
        %v1235 = vpop.permute.xlu0 %1234
        %1236 = vrot.lane.b32.xlu0 %v890, 112
        %v1237 = vpop.permute.xlu0 %1236
        %v1238 = vsel %vm893, %v1233, 0
        %v1240 = vsel %vm893, %v1235, 0
        %v1242 = vsel %vm893, %v1237, 0
        %1244 = vmatprep.subr.mxu0 0.0
        %1245 = vmatpush1.xpose.msra.mxu0 %v1240
        %1246 = vmatprep.subr.mxu0 0.0
        %1247 = vmatpush1.xpose.msra.mxu0 %v1242
        %1248 = vmatprep.subr.mxu0 0.0
        %1249 = vmatpush1.xpose.msra.mxu0 0.0
        %1250 = vmatprep.subr.mxu0 0.0
        %1251 = vmatpush1.xpose.msra.mxu0 0.0
        %1252 = vmatprep.subr.mxu0 0.0
        %1253 = vmatpush1.xpose.msra.mxu0 0.0
        %1254 = vmatprep.subr.mxu0 0.0
        %1255 = vmatpush1.xpose.msra.mxu0 0.0
        %1256 = vmatprep.subr.mxu0 0.0
        %1257 = vmatpush1.xpose.msra.mxu0 0.0
        %1258 = vmatprep.subr.mxu0 0.0
        %1259 = vmatpush1.xpose.msra.mxu0 0.0
        %1260 = vmatprep.subr.mxu0 0.0
        %1261 = vmatpush1.xpose.msra.mxu0 0.0
        %1262 = vmatprep.subr.mxu0 0.0
        %1263 = vmatpush1.xpose.msra.mxu0 0.0
        %1264 = vmatprep.subr.mxu0 0.0
        %1265 = vmatpush1.xpose.msra.mxu0 0.0
        %1266 = vmatprep.subr.mxu0 0.0
        %1267 = vmatpush1.xpose.msra.mxu0 0.0
        %1268 = vmatprep.subr.mxu0 0.0
        %1269 = vmatpush1.xpose.msra.mxu0 0.0
        %1270 = vmatprep.subr.mxu0 0.0
        %1271 = vmatpush1.xpose.msra.mxu0 0.0
        %1272 = vmatprep.subr.mxu0 0.0
        %1273 = vmatpush1.xpose.msra.mxu0 0.0
        %1274 = vmatprep.subr.mxu0 0.0
        %1275 = vmatpush1.xpose.msra.mxu0 0.0
        %1276 = vmatprep.subr.mxu0 0.0
        %1277 = vmatpush1.xpose.msra.mxu0 0.0
        %1278 = vmatprep.subr.mxu0 0.0
        %1279 = vmatpush1.xpose.msra.mxu0 0.0
        %1280 = vmatprep.subr.mxu0 0.0
        %1281 = vmatpush1.xpose.msra.mxu0 0.0
        %1282 = vmatprep.subr.mxu0 0.0
        %1283 = vmatpush1.xpose.msra.mxu0 0.0
        %1284 = vmatprep.subr.mxu0 0.0
        %1285 = vmatpush1.xpose.msra.mxu0 0.0
        %1286 = vmatprep.subr.mxu0 0.0
        %1287 = vmatpush1.xpose.msra.mxu0 0.0
        %1288 = vmatprep.subr.mxu0 0.0
        %1289 = vmatpush1.xpose.msra.mxu0 0.0
        %1290 = vmatprep.subr.mxu0 0.0
        %1291 = vmatpush1.xpose.msra.mxu0 0.0
        %1292 = vmatprep.subr.mxu0 0.0
        %1293 = vmatpush1.xpose.msra.mxu0 0.0
        %1294 = vmatprep.subr.mxu0 0.0
        %1295 = vmatpush1.xpose.msra.mxu0 0.0
        %1296 = vmatprep.subr.mxu0 0.0
        %1297 = vmatpush1.xpose.msra.mxu0 0.0
        %1298 = vmatprep.subr.mxu0 0.0
        %1299 = vmatpush1.xpose.msra.mxu0 0.0
        %1300 = vmatprep.subr.mxu0 0.0
        %1301 = vmatpush1.xpose.msra.mxu0 0.0
        %1302 = vmatprep.subr.mxu0 0.0
        %1303 = vmatpush1.xpose.msra.mxu0 0.0
        %1304 = vmatprep.subr.mxu0 0.0
        %1305 = vmatpush1.xpose.msra.mxu0 0.0
        %1306 = vmatprep.subr.mxu0 0.0
        %1307 = vmatpush1.xpose.msra.mxu0 0.0
        %1308 = vmatprep.mubr.f32.mxu0 0.0
        %1309 = vmatmul.mubr.f32.gmra.mrb[0].mxu0 %v1238
        %v1310 = vpop.f32.mrb[0].mxu0
        %v1311 = vadd.f32 0.0, %v1310
        %v1312 = vpop.f32.mrb[0].mxu0
        %1313 = vdwg.mxu0
        %v1314 = vsel %vm973, %v1311, -inf
        %1315 = vmax.xlane.f32.xlu0 %v1314
        %v1316 = vpop.xlane.xlu0 %1315
        %v1317 = vsub.f32 %v1311, %v1316
        %v1318 = vmul.f32 %v1317, 1.442695
        %v1319 = vpow.pop %v1318
        %v1320 = vsel %vm973, %v1319, 0.0
        %1321 = vadd.xlane.f32.xlu0 %v1320
        %v1322 = vpop.xlane.xlu0 %1321
        %v1323 = vrcp.pop %v1322
        %v1324 = vmul.f32 %v1319, %v1323
        %1325 = vrot.lane.b32.xlu0 %v891, 112
        %v1326 = vpop.permute.xlu0 %1325
        %1327 = vrot.lane.b32.xlu0 %v892, 112
        %v1328 = vpop.permute.xlu0 %1327
        %v1332 = vsel %vm973, %v1324, 0
        %1334 = vmatprep.subr.mxu0 0.0
        %1335 = vmatpush1.msra.mxu0 %v1326
        %1336 = vmatprep.subr.mxu0 0.0
        %1337 = vmatpush1.msra.mxu0 %v1328
        %1338 = vmatprep.subr.mxu0 0.0
        %1339 = vmatpush1.msra.mxu0 0.0
        %1340 = vmatprep.subr.mxu0 0.0
        %1341 = vmatpush1.msra.mxu0 0.0
        %1342 = vmatprep.subr.mxu0 0.0
        %1343 = vmatpush1.msra.mxu0 0.0
        %1344 = vmatprep.subr.mxu0 0.0
        %1345 = vmatpush1.msra.mxu0 0.0
        %1346 = vmatprep.subr.mxu0 0.0
        %1347 = vmatpush1.msra.mxu0 0.0
        %1348 = vmatprep.subr.mxu0 0.0
        %1349 = vmatpush1.msra.mxu0 0.0
        %1350 = vmatprep.subr.mxu0 0.0
        %1351 = vmatpush1.msra.mxu0 0.0
        %1352 = vmatprep.subr.mxu0 0.0
        %1353 = vmatpush1.msra.mxu0 0.0
        %1354 = vmatprep.subr.mxu0 0.0
        %1355 = vmatpush1.msra.mxu0 0.0
        %1356 = vmatprep.subr.mxu0 0.0
        %1357 = vmatpush1.msra.mxu0 0.0
        %1358 = vmatprep.subr.mxu0 0.0
        %1359 = vmatpush1.msra.mxu0 0.0
        %1360 = vmatprep.subr.mxu0 0.0
        %1361 = vmatpush1.msra.mxu0 0.0
        %1362 = vmatprep.subr.mxu0 0.0
        %1363 = vmatpush1.msra.mxu0 0.0
        %1364 = vmatprep.subr.mxu0 0.0
        %1365 = vmatpush1.msra.mxu0 0.0
        %1366 = vmatprep.subr.mxu0 0.0
        %1367 = vmatpush1.msra.mxu0 0.0
        %1368 = vmatprep.subr.mxu0 0.0
        %1369 = vmatpush1.msra.mxu0 0.0
        %1370 = vmatprep.subr.mxu0 0.0
        %1371 = vmatpush1.msra.mxu0 0.0
        %1372 = vmatprep.subr.mxu0 0.0
        %1373 = vmatpush1.msra.mxu0 0.0
        %1374 = vmatprep.subr.mxu0 0.0
        %1375 = vmatpush1.msra.mxu0 0.0
        %1376 = vmatprep.subr.mxu0 0.0
        %1377 = vmatpush1.msra.mxu0 0.0
        %1378 = vmatprep.subr.mxu0 0.0
        %1379 = vmatpush1.msra.mxu0 0.0
        %1380 = vmatprep.subr.mxu0 0.0
        %1381 = vmatpush1.msra.mxu0 0.0
        %1382 = vmatprep.subr.mxu0 0.0
        %1383 = vmatpush1.msra.mxu0 0.0
        %1384 = vmatprep.subr.mxu0 0.0
        %1385 = vmatpush1.msra.mxu0 0.0
        %1386 = vmatprep.subr.mxu0 0.0
        %1387 = vmatpush1.msra.mxu0 0.0
        %1388 = vmatprep.subr.mxu0 0.0
        %1389 = vmatpush1.msra.mxu0 0.0
        %1390 = vmatprep.subr.mxu0 0.0
        %1391 = vmatpush1.msra.mxu0 0.0
        %1392 = vmatprep.subr.mxu0 0.0
        %1393 = vmatpush1.msra.mxu0 0.0
        %1394 = vmatprep.subr.mxu0 0.0
        %1395 = vmatpush1.msra.mxu0 0.0
        %1396 = vmatprep.subr.mxu0 0.0
        %1397 = vmatpush1.msra.mxu0 0.0
        %1398 = vmatprep.mubr.f32.mxu0 0.0
        %1399 = vmatmul.mubr.f32.gmra.mrb[0].mxu0 %v1332
        %v1400 = vpop.f32.mrb[0].mxu0
        %v1401 = vadd.f32 0.0, %v1400
        %v1402 = vpop.f32.mrb[0].mxu0
        %1403 = vdwg.mxu0
        %1404 = vrot.lane.b32.xlu0 %v888, 104
        %v1405 = vpop.permute.xlu0 %1404
        %1406 = vrot.lane.b32.xlu0 %v889, 104
        %v1407 = vpop.permute.xlu0 %1406
        %1408 = vrot.lane.b32.xlu0 %v890, 104
        %v1409 = vpop.permute.xlu0 %1408
        %v1410 = vsel %vm893, %v1405, 0
        %v1412 = vsel %vm893, %v1407, 0
        %v1414 = vsel %vm893, %v1409, 0
        %1416 = vmatprep.subr.mxu0 0.0
        %1417 = vmatpush1.xpose.msra.mxu0 %v1412
        %1418 = vmatprep.subr.mxu0 0.0
        %1419 = vmatpush1.xpose.msra.mxu0 %v1414
        %1420 = vmatprep.subr.mxu0 0.0
        %1421 = vmatpush1.xpose.msra.mxu0 0.0
        %1422 = vmatprep.subr.mxu0 0.0
        %1423 = vmatpush1.xpose.msra.mxu0 0.0
        %1424 = vmatprep.subr.mxu0 0.0
        %1425 = vmatpush1.xpose.msra.mxu0 0.0
        %1426 = vmatprep.subr.mxu0 0.0
        %1427 = vmatpush1.xpose.msra.mxu0 0.0
        %1428 = vmatprep.subr.mxu0 0.0
        %1429 = vmatpush1.xpose.msra.mxu0 0.0
        %1430 = vmatprep.subr.mxu0 0.0
        %1431 = vmatpush1.xpose.msra.mxu0 0.0
        %1432 = vmatprep.subr.mxu0 0.0
        %1433 = vmatpush1.xpose.msra.mxu0 0.0
        %1434 = vmatprep.subr.mxu0 0.0
        %1435 = vmatpush1.xpose.msra.mxu0 0.0
        %1436 = vmatprep.subr.mxu0 0.0
        %1437 = vmatpush1.xpose.msra.mxu0 0.0
        %1438 = vmatprep.subr.mxu0 0.0
        %1439 = vmatpush1.xpose.msra.mxu0 0.0
        %1440 = vmatprep.subr.mxu0 0.0
        %1441 = vmatpush1.xpose.msra.mxu0 0.0
        %1442 = vmatprep.subr.mxu0 0.0
        %1443 = vmatpush1.xpose.msra.mxu0 0.0
        %1444 = vmatprep.subr.mxu0 0.0
        %1445 = vmatpush1.xpose.msra.mxu0 0.0
        %1446 = vmatprep.subr.mxu0 0.0
        %1447 = vmatpush1.xpose.msra.mxu0 0.0
        %1448 = vmatprep.subr.mxu0 0.0
        %1449 = vmatpush1.xpose.msra.mxu0 0.0
        %1450 = vmatprep.subr.mxu0 0.0
        %1451 = vmatpush1.xpose.msra.mxu0 0.0
        %1452 = vmatprep.subr.mxu0 0.0
        %1453 = vmatpush1.xpose.msra.mxu0 0.0
        %1454 = vmatprep.subr.mxu0 0.0
        %1455 = vmatpush1.xpose.msra.mxu0 0.0
        %1456 = vmatprep.subr.mxu0 0.0
        %1457 = vmatpush1.xpose.msra.mxu0 0.0
        %1458 = vmatprep.subr.mxu0 0.0
        %1459 = vmatpush1.xpose.msra.mxu0 0.0
        %1460 = vmatprep.subr.mxu0 0.0
        %1461 = vmatpush1.xpose.msra.mxu0 0.0
        %1462 = vmatprep.subr.mxu0 0.0
        %1463 = vmatpush1.xpose.msra.mxu0 0.0
        %1464 = vmatprep.subr.mxu0 0.0
        %1465 = vmatpush1.xpose.msra.mxu0 0.0
        %1466 = vmatprep.subr.mxu0 0.0
        %1467 = vmatpush1.xpose.msra.mxu0 0.0
        %1468 = vmatprep.subr.mxu0 0.0
        %1469 = vmatpush1.xpose.msra.mxu0 0.0
        %1470 = vmatprep.subr.mxu0 0.0
        %1471 = vmatpush1.xpose.msra.mxu0 0.0
        %1472 = vmatprep.subr.mxu0 0.0
        %1473 = vmatpush1.xpose.msra.mxu0 0.0
        %1474 = vmatprep.subr.mxu0 0.0
        %1475 = vmatpush1.xpose.msra.mxu0 0.0
        %1476 = vmatprep.subr.mxu0 0.0
        %1477 = vmatpush1.xpose.msra.mxu0 0.0
        %1478 = vmatprep.subr.mxu0 0.0
        %1479 = vmatpush1.xpose.msra.mxu0 0.0
        %1480 = vmatprep.mubr.f32.mxu0 0.0
        %1481 = vmatmul.mubr.f32.gmra.mrb[0].mxu0 %v1410
        %v1482 = vpop.f32.mrb[0].mxu0
        %v1483 = vadd.f32 0.0, %v1482
        %v1484 = vpop.f32.mrb[0].mxu0
        %1485 = vdwg.mxu0
        %v1486 = vsel %vm973, %v1483, -inf
        %1487 = vmax.xlane.f32.xlu0 %v1486
        %v1488 = vpop.xlane.xlu0 %1487
        %v1489 = vsub.f32 %v1483, %v1488
        %v1490 = vmul.f32 %v1489, 1.442695
        %v1491 = vpow.pop %v1490
        %v1492 = vsel %vm973, %v1491, 0.0
        %1493 = vadd.xlane.f32.xlu0 %v1492
        %v1494 = vpop.xlane.xlu0 %1493
        %v1495 = vrcp.pop %v1494
        %v1496 = vmul.f32 %v1491, %v1495
        %1497 = vrot.lane.b32.xlu0 %v891, 104
        %v1498 = vpop.permute.xlu0 %1497
        %1499 = vrot.lane.b32.xlu0 %v892, 104
        %v1500 = vpop.permute.xlu0 %1499
        %v1504 = vsel %vm973, %v1496, 0
        %1506 = vmatprep.subr.mxu0 0.0
        %1507 = vmatpush1.msra.mxu0 %v1498
        %1508 = vmatprep.subr.mxu0 0.0
        %1509 = vmatpush1.msra.mxu0 %v1500
        %1510 = vmatprep.subr.mxu0 0.0
        %1511 = vmatpush1.msra.mxu0 0.0
        %1512 = vmatprep.subr.mxu0 0.0
        %1513 = vmatpush1.msra.mxu0 0.0
        %1514 = vmatprep.subr.mxu0 0.0
        %1515 = vmatpush1.msra.mxu0 0.0
        %1516 = vmatprep.subr.mxu0 0.0
        %1517 = vmatpush1.msra.mxu0 0.0
        %1518 = vmatprep.subr.mxu0 0.0
        %1519 = vmatpush1.msra.mxu0 0.0
        %1520 = vmatprep.subr.mxu0 0.0
        %1521 = vmatpush1.msra.mxu0 0.0
        %1522 = vmatprep.subr.mxu0 0.0
        %1523 = vmatpush1.msra.mxu0 0.0
        %1524 = vmatprep.subr.mxu0 0.0
        %1525 = vmatpush1.msra.mxu0 0.0
        %1526 = vmatprep.subr.mxu0 0.0
        %1527 = vmatpush1.msra.mxu0 0.0
        %1528 = vmatprep.subr.mxu0 0.0
        %1529 = vmatpush1.msra.mxu0 0.0
        %1530 = vmatprep.subr.mxu0 0.0
        %1531 = vmatpush1.msra.mxu0 0.0
        %1532 = vmatprep.subr.mxu0 0.0
        %1533 = vmatpush1.msra.mxu0 0.0
        %1534 = vmatprep.subr.mxu0 0.0
        %1535 = vmatpush1.msra.mxu0 0.0
        %1536 = vmatprep.subr.mxu0 0.0
        %1537 = vmatpush1.msra.mxu0 0.0
        %1538 = vmatprep.subr.mxu0 0.0
        %1539 = vmatpush1.msra.mxu0 0.0
        %1540 = vmatprep.subr.mxu0 0.0
        %1541 = vmatpush1.msra.mxu0 0.0
        %1542 = vmatprep.subr.mxu0 0.0
        %1543 = vmatpush1.msra.mxu0 0.0
        %1544 = vmatprep.subr.mxu0 0.0
        %1545 = vmatpush1.msra.mxu0 0.0
        %1546 = vmatprep.subr.mxu0 0.0
        %1547 = vmatpush1.msra.mxu0 0.0
        %1548 = vmatprep.subr.mxu0 0.0
        %1549 = vmatpush1.msra.mxu0 0.0
        %1550 = vmatprep.subr.mxu0 0.0
        %1551 = vmatpush1.msra.mxu0 0.0
        %1552 = vmatprep.subr.mxu0 0.0
        %1553 = vmatpush1.msra.mxu0 0.0
        %1554 = vmatprep.subr.mxu0 0.0
        %1555 = vmatpush1.msra.mxu0 0.0
        %1556 = vmatprep.subr.mxu0 0.0
        %1557 = vmatpush1.msra.mxu0 0.0
        %1558 = vmatprep.subr.mxu0 0.0
        %1559 = vmatpush1.msra.mxu0 0.0
        %1560 = vmatprep.subr.mxu0 0.0
        %1561 = vmatpush1.msra.mxu0 0.0
        %1562 = vmatprep.subr.mxu0 0.0
        %1563 = vmatpush1.msra.mxu0 0.0
        %1564 = vmatprep.subr.mxu0 0.0
        %1565 = vmatpush1.msra.mxu0 0.0
        %1566 = vmatprep.subr.mxu0 0.0
        %1567 = vmatpush1.msra.mxu0 0.0
        %1568 = vmatprep.subr.mxu0 0.0
        %1569 = vmatpush1.msra.mxu0 0.0
        %1570 = vmatprep.mubr.f32.mxu0 0.0
        %1571 = vmatmul.mubr.f32.gmra.mrb[0].mxu0 %v1504
        %v1572 = vpop.f32.mrb[0].mxu0
        %v1573 = vadd.f32 0.0, %v1572
        %v1574 = vpop.f32.mrb[0].mxu0
        %1575 = vdwg.mxu0
        %1577 = vrot.lane.b32.xlu0 %v1229, 8
        %v1578 = vpop.permute.xlu0 %1577
        %1581 = vrot.lane.b32.xlu0 %v1401, 16
        %v1582 = vpop.permute.xlu0 %1581
        %1585 = vrot.lane.b32.xlu0 %v1573, 24
        %v1586 = vpop.permute.xlu0 %1585
        %v1588 = vsel %vm893, %v1055, %v1578
        %v1589 = vsel %vm973, %v1588, %v1582
        %vm1590 = vcmask 195584
        %v1591 = vsel %vm1590, %v1589, %v1586
        %v1592 = vld [vmem:[#allocation19] sm:$0xff]
        %v1593 = vld [vmem:[#allocation19 + $0x8] sm:$0xff]
        %v1594 = vld [vmem:[#allocation19 + $0x10] sm:$0xff]
        %v1595 = vld [vmem:[#allocation19 + $0x18] sm:$0xff]
        %v1596 = vld [vmem:[#allocation21] sm:$0x1]
        %v1598 = vlaneseq
        %v1599 = vshrl.u32 %v1598, 7
        %v1600 = vsub.s32 0, %v1599
        %v1601 = vrot.slane %v1596, %v1600
        %v1604 = vsel %vm814, %v1591, 0
        %1606 = vmatprep.subr.mxu0 0.0
        %1607 = vmatpush1.msra.mxu0 %v1592
        %1608 = vmatprep.subr.mxu0 0.0
        %1609 = vmatpush1.msra.mxu0 %v1593
        %1610 = vmatprep.subr.mxu0 0.0
        %1611 = vmatpush1.msra.mxu0 %v1594
        %1612 = vmatprep.subr.mxu0 0.0
        %1613 = vmatpush1.msra.mxu0 %v1595
        %1614 = vmatprep.subr.mxu0 0.0
        %1615 = vmatpush1.msra.mxu0 0.0
        %1616 = vmatprep.subr.mxu0 0.0
        %1617 = vmatpush1.msra.mxu0 0.0
        %1618 = vmatprep.subr.mxu0 0.0
        %1619 = vmatpush1.msra.mxu0 0.0
        %1620 = vmatprep.subr.mxu0 0.0
        %1621 = vmatpush1.msra.mxu0 0.0
        %1622 = vmatprep.subr.mxu0 0.0
        %1623 = vmatpush1.msra.mxu0 0.0
        %1624 = vmatprep.subr.mxu0 0.0
        %1625 = vmatpush1.msra.mxu0 0.0
        %1626 = vmatprep.subr.mxu0 0.0
        %1627 = vmatpush1.msra.mxu0 0.0
        %1628 = vmatprep.subr.mxu0 0.0
        %1629 = vmatpush1.msra.mxu0 0.0
        %1630 = vmatprep.subr.mxu0 0.0
        %1631 = vmatpush1.msra.mxu0 0.0
        %1632 = vmatprep.subr.mxu0 0.0
        %1633 = vmatpush1.msra.mxu0 0.0
        %1634 = vmatprep.subr.mxu0 0.0
        %1635 = vmatpush1.msra.mxu0 0.0
        %1636 = vmatprep.subr.mxu0 0.0
        %1637 = vmatpush1.msra.mxu0 0.0
        %1638 = vmatprep.subr.mxu0 0.0
        %1639 = vmatpush1.msra.mxu0 0.0
        %1640 = vmatprep.subr.mxu0 0.0
        %1641 = vmatpush1.msra.mxu0 0.0
        %1642 = vmatprep.subr.mxu0 0.0
        %1643 = vmatpush1.msra.mxu0 0.0
        %1644 = vmatprep.subr.mxu0 0.0
        %1645 = vmatpush1.msra.mxu0 0.0
        %1646 = vmatprep.subr.mxu0 0.0
        %1647 = vmatpush1.msra.mxu0 0.0
        %1648 = vmatprep.subr.mxu0 0.0
        %1649 = vmatpush1.msra.mxu0 0.0
        %1650 = vmatprep.subr.mxu0 0.0
        %1651 = vmatpush1.msra.mxu0 0.0
        %1652 = vmatprep.subr.mxu0 0.0
        %1653 = vmatpush1.msra.mxu0 0.0
        %1654 = vmatprep.subr.mxu0 0.0
        %1655 = vmatpush1.msra.mxu0 0.0
        %1656 = vmatprep.subr.mxu0 0.0
        %1657 = vmatpush1.msra.mxu0 0.0
        %1658 = vmatprep.subr.mxu0 0.0
        %1659 = vmatpush1.msra.mxu0 0.0
        %1660 = vmatprep.subr.mxu0 0.0
        %1661 = vmatpush1.msra.mxu0 0.0
        %1662 = vmatprep.subr.mxu0 0.0
        %1663 = vmatpush1.msra.mxu0 0.0
        %1664 = vmatprep.subr.mxu0 0.0
        %1665 = vmatpush1.msra.mxu0 0.0
        %1666 = vmatprep.subr.mxu0 0.0
        %1667 = vmatpush1.msra.mxu0 0.0
        %1668 = vmatprep.subr.mxu0 0.0
        %1669 = vmatpush1.msra.mxu0 0.0
        %1670 = vmatprep.mubr.f32.mxu0 0.0
        %1671 = vmatmul.mubr.f32.gmra.mrb[0].mxu0 %v1604
        %v1672 = vpop.f32.mrb[0].mxu0
        %v1673 = vadd.f32 %v1601, %v1672
        %v1674 = vpop.f32.mrb[0].mxu0
        %1675 = vdwg.mxu0
        %1676 = vst.msk [vmem:[%s604] sm:$0xff] %vm814, %v1673
        %s1677 = sand.u32 %s305, 1
        %s1678 = scalar_lea.sflag [#allocation6], %s1677
        %s1679 = sand.u32 %s305, 1
        %s1680 = smul.addr %s1679, 8
        %s1681 = scalar_lea.vmem [#allocation22], %s1680
        // Predicated region
        $region113: #{tpu_custom_call.1} parent=63 // pred_check
          %p1682 = pneg %p315
        $region114: #{tpu_custom_call.1} parent=63 // pred_check_branch
          %1684 = sbr.rel (%p1682) target = $region116
        $region115: #{tpu_custom_call.1} parent=63 // pred_region
          %s1686 = ssub.s32 128, 128
          %1687 = vsyncadd %s1678, %s1686
          %s1688 = smul.addr %s39, 2
          %s1689 = sadd.s32 %s40, %s1688
          %s1690 = smul.addr %s1689, 128
          %s1691 = scalar_lea.hbm %s11, %s1690
          %s1693 = sshll.u32 %s1681, 4
          %s1694 = int_to_ptr.vmem [resolvable:$true] %s1693
          %1696 = dma.vmem_to_hbm [thread:$0]  %s1694, 128, %s1691, %s1678
        $region116: #{tpu_custom_call.1} parent=63 // pred_fallthru
          _
      $region64: #{tpu_custom_call.1} parent=5 // pred_fallthru
        _
      %p1697 = scmp.le.s32.totalorder 2, %s30
      // Predicated region
      $region117: #{tpu_custom_call.1} parent=5 // pred_check
        %p1698 = pneg %p1697
      $region118: #{tpu_custom_call.1} parent=5 // pred_check_branch
        %1700 = sbr.rel (%p1698) target = $region120
      $region119: #{tpu_custom_call.1} parent=5 // pred_region
        %s1701 = ssub.s32 %s30, 2
        // Predicated region
        $region121: #{tpu_custom_call.1} parent=119 // pred_check
          %p1702 = pneg %p321
        $region122: #{tpu_custom_call.1} parent=119 // pred_check_branch
          %1704 = sbr.rel (%p1702) target = $region124
        $region123: #{tpu_custom_call.1} parent=119 // pred_region
          %s1705 = sand.u32 %s306, 1
          %s1706 = scalar_lea.sflag [#allocation6], %s1705
          %s1707 = sand.u32 %s306, 1
          %s1708 = smul.addr %s1707, 8
          %s1709 = scalar_lea.vmem [#allocation22], %s1708
          %1710 = dma.done %s1706, 128
        $region124: #{tpu_custom_call.1} parent=119 // pred_fallthru
          _
      $region120: #{tpu_custom_call.1} parent=5 // pred_fallthru
        _
    $region6: #{tpu_custom_call.1} parent=1 // loop_footer
      %s34 = sadd.s32 1, %s30
    $region7: #{tpu_custom_call.1} parent=1 // loop_footer_branch
      %29 = sbr.rel target = $region3
    $region8: #{tpu_custom_call.1} parent=1 // loop_exit
      _
    %1711 = vsyncpa [#allocation5], 1
    %s1712 = scalar_lea.sflag [#allocation5], 1
    %1713 = vsyncpa %s1712, 1
    %1714 = vsyncpa [#allocation8], 1
    %s1715 = scalar_lea.sflag [#allocation8], 1
    %1716 = vsyncpa %s1715, 1
    %1717 = vsyncpa [#allocation11], 1
    %1718 = vsyncpa [#allocation14], 1
    %1719 = vsyncpa [#allocation17], 1
    %1720 = vsyncpa [#allocation20], 1
    %1721 = vsyncpa [#allocation6], 1
    %s1722 = scalar_lea.sflag [#allocation6], 1
    %1723 = vsyncpa %s1722, 1

</llo_original>
